<compile_context>
chip_gen: v7x
topology: tpu7x:2x2x1
jax: 0.10.0
libtpu: 0.0.40
codegen_flags: <defaults>
</compile_context>

<pallas_src>
import functools
import math

import jax
import jax.numpy as jnp
from jax.experimental import pallas as pl
from jax.experimental.pallas import tpu as pltpu


def _round_up(x, m):
    return ((x + m - 1) // m) * m


def _layernorm(x, gamma, beta, eps=1e-5):
    mean = jnp.mean(x, axis=-1, keepdims=True)
    var = jnp.mean(jnp.square(x - mean), axis=-1, keepdims=True)
    return (x - mean) * jax.lax.rsqrt(var + eps) * gamma + beta


def _softplus(x):
    # matches F.softplus for moderate x: log(1 + exp(x)), numerically stable
    return jnp.logaddexp(x, 0.0)


# parameter argument order shared by wrapper and kernel
_PARAM_ORDER = (
    "wt", "bt", "gt", "bet",
    "w1h", "w1a", "b1", "g1", "be1",
    "w2", "b2", "g2", "be2",
    "w_head", "b_head", "std_mask",
)


def mog_critic_kernel(
    obs_ref, act_ref,
    wt_ref, bt_ref, gt_ref, bet_ref,            # trunk Linear + LayerNorm
    w1h_ref, w1a_ref, b1_ref, g1_ref, be1_ref,  # linear1 (split weight) + ln1
    w2_ref, b2_ref, g2_ref, be2_ref,            # linear2 + ln2
    wh_ref, bh_ref, stdmask_ref,                # fused head [hidden, Cpad] + std mask
    out_ref,                                    # [block_b, Cpad]
    *, std_scale, std_lo, std_hi,
):
    f32 = jnp.float32
    obs = obs_ref[...]
    act = act_ref[...]

    def mm(a, w_ref):
        w = w_ref[...]
        # cast activation to the (bf16 by default) weight dtype at the MXU
        # input, accumulate in f32 so LayerNorm/softplus numerics stay stable.
        return jnp.dot(a.astype(w.dtype), w, preferred_element_type=f32)

    # trunk: Linear + LayerNorm
    h = mm(obs, wt_ref) + bt_ref[...]
    h = _layernorm(h, gt_ref[...], bet_ref[...])

    # cat([h, action]) @ W1  ==  h @ W1[:F] + action @ W1[F:]  (weight pre-split;
    # avoids an in-VMEM concat at a non-128-aligned lane offset)
    x = mm(h, w1h_ref) + mm(act, w1a_ref) + b1_ref[...]
    x = jnp.maximum(_layernorm(x, g1_ref[...], be1_ref[...]), 0.0)

    x = mm(x, w2_ref) + b2_ref[...]
    x = jnp.maximum(_layernorm(x, g2_ref[...], be2_ref[...]), 0.0)

    # fused heads: columns [0:C)=mus, [C:2C)=stdevs(raw), [2C:3C)=logits, rest pad
    y = mm(x, wh_ref) + bh_ref[...]

    # std transform only on the 128-aligned lane band containing the std columns
    band = y[:, std_lo:std_hi]
    mask = stdmask_ref[:, std_lo:std_hi]                     # (1, W), 1.0 on std cols
    band = jnp.where(mask > 0.0, std_scale * _softplus(band) + 1e-4, band)

    if std_lo == 0 and std_hi == y.shape[1]:
        out_ref[...] = band                                  # band covers whole slab
    else:
        out_ref[...] = y
        out_ref[:, std_lo:std_hi] = band


def init_params(key, repr_dim, action_dim, feature_dim, hidden_dim, num_components):
    """Deterministic PyTorch-style init: U(-1/sqrt(fan_in), 1/sqrt(fan_in))."""
    def linear(k, fan_in, fan_out):
        kw, kb = jax.random.split(k)
        bound = 1.0 / math.sqrt(fan_in)
        w = jax.random.uniform(kw, (fan_in, fan_out), jnp.float32, -bound, bound)
        b = jax.random.uniform(kb, (1, fan_out), jnp.float32, -bound, bound)
        return w, b

    ks = jax.random.split(key, 6)
    p = {}
    p["wt"], p["bt"] = linear(ks[0], repr_dim, feature_dim)
    p["gt"] = jnp.ones((1, feature_dim), jnp.float32)
    p["bet"] = jnp.zeros((1, feature_dim), jnp.float32)

    w1, p["b1"] = linear(ks[1], feature_dim + action_dim, hidden_dim)
    p["w1h"] = w1[:feature_dim, :]
    p["w1a"] = w1[feature_dim:, :]
    p["g1"] = jnp.ones((1, hidden_dim), jnp.float32)
    p["be1"] = jnp.zeros((1, hidden_dim), jnp.float32)

    p["w2"], p["b2"] = linear(ks[2], hidden_dim, hidden_dim)
    p["g2"] = jnp.ones((1, hidden_dim), jnp.float32)
    p["be2"] = jnp.zeros((1, hidden_dim), jnp.float32)

    p["wmu"], p["bmu"] = linear(ks[3], hidden_dim, num_components)
    p["wsd"], p["bsd"] = linear(ks[4], hidden_dim, num_components)
    p["wlg"], p["blg"] = linear(ks[5], hidden_dim, num_components)
    return p


def prepare_params(raw, *, weight_dtype=jnp.bfloat16):
    """One-time packing: fused/lane-padded head, std mask, optional bf16 weights.

    Call this once (outside the training loop) so the packing and casts are not
    re-materialized in HBM on every forward call.
    """
    if isinstance(raw, dict) and raw.get("_prepared", False):
        return raw

    hidden_dim = raw["w2"].shape[1]
    C = raw["wmu"].shape[1]
    Cpad = _round_up(max(3 * C, 128), 128)

    # fused, lane-padded head weight: [mus | stdevs | logits | zero pad]
    w_head = jnp.zeros((hidden_dim, Cpad), jnp.float32)
    w_head = w_head.at[:, 0:C].set(raw["wmu"])
    w_head = w_head.at[:, C:2 * C].set(raw["wsd"])
    w_head = w_head.at[:, 2 * C:3 * C].set(raw["wlg"])
    b_head = jnp.zeros((1, Cpad), jnp.float32)
    b_head = b_head.at[:, 0:C].set(raw["bmu"])
    b_head = b_head.at[:, C:2 * C].set(raw["bsd"])
    b_head = b_head.at[:, 2 * C:3 * C].set(raw["blg"])
    std_mask = jnp.zeros((1, Cpad), jnp.float32).at[:, C:2 * C].set(1.0)

    def w(x):
        return x.astype(weight_dtype)

    p = {
        "_prepared": True,
        "num_components": C,
        "wt": w(raw["wt"]), "bt": raw["bt"], "gt": raw["gt"], "bet": raw["bet"],
        "w1h": w(raw["w1h"]), "w1a": w(raw["w1a"]),
        "b1": raw["b1"], "g1": raw["g1"], "be1": raw["be1"],
        "w2": w(raw["w2"]), "b2": raw["b2"], "g2": raw["g2"], "be2": raw["be2"],
        "w_head": w(w_head), "b_head": b_head, "std_mask": std_mask,
    }
    return p


def _vmem_budget_bytes():
    try:
        cap = int(pltpu.get_tpu_info().vmem_capacity_bytes)
    except Exception:
        cap = 64 * 1024 * 1024          # be conservative (v7x per-TC VMEM)
    # leave Mosaic internal-scratch headroom: ~54 MiB on v7x, ~109 MiB on v5e/v6e
    return max(int(cap * 0.85), 32 * 1024 * 1024)


def mog_critic_forward(obs, action, params, *, init_scale=0.001,
                       block_b=None, weight_dtype=jnp.bfloat16):
    if not (isinstance(params, dict) and params.get("_prepared", False)):
        params = prepare_params(params, weight_dtype=weight_dtype)

    B, repr_dim = obs.shape
    action_dim = action.shape[1]
    feature_dim = params["wt"].shape[1]
    hidden_dim = params["w2"].shape[1]
    C = int(params["num_components"])
    Cpad = int(params["w_head"].shape[1])

    # 128-aligned lane band containing the std columns [C, 2C)
    std_lo = (C // 128) * 128
    std_hi = _round_up(2 * C, 128)

    param_args = [params[k] for k in _PARAM_ORDER]
    param_bytes = sum(int(a.size) * a.dtype.itemsize for a in param_args)

    # ---- VMEM-aware row-tile choice -----------------------------------------
    budget = _vmem_budget_bytes()
    # per-row bytes: double-buffered obs/action/out blocks + intermediate slabs
    per_row_bytes = 4 * (3 * (repr_dim + action_dim)
                         + feature_dim + 4 * hidden_dim + 4 * Cpad)
    avail = budget - 2 * param_bytes - 4 * 1024 * 1024
    block_cap = max(8, (avail // max(per_row_bytes, 1)) // 8 * 8)

    if block_b is None:
        if B >= 1024:
            desired = 512                      # big tiles amortize grid-step overhead
        elif B >= 512:
            desired = 256
        elif B >= 256:
            desired = 128
        elif B >= 16:
            desired = _round_up(-(-B // 2), 8)  # guarantee grid >= 2 (v7x dual-TC)
        else:
            desired = _round_up(B, 8)
        block_b = max(8, min(desired, block_cap, _round_up(B, 8)))
    else:
        block_b = max(8, _round_up(block_b, 8))

    grid_n = pl.cdiv(B, block_b)               # partial last block: stores clipped

    vmem_need = 2 * param_bytes + per_row_bytes * block_b + 8 * 1024 * 1024
    vmem_limit = int(min(max(vmem_need, 32 * 1024 * 1024), budget))

    # ---- specs ---------------------------------------------------------------
    def make_in_specs(use_buffered):
        def full_spec(arr):
            # whole (small) parameter tensor resident in VMEM; constant block
            # index => single-buffer it (no pointless 2x VMEM / re-DMA).
            if use_buffered:
                return pl.BlockSpec(arr.shape, lambda i: (0, 0),
                                    pipeline_mode=pl.Buffered(1))
            return pl.BlockSpec(arr.shape, lambda i: (0, 0))

        return [
            pl.BlockSpec((block_b, repr_dim), lambda i: (i, 0)),
            pl.BlockSpec((block_b, action_dim), lambda i: (i, 0)),
        ] + [full_spec(a) for a in param_args]

    out_spec = pl.BlockSpec((block_b, Cpad), lambda i: (i, 0))
    out_shape = jax.ShapeDtypeStruct((B, Cpad), jnp.float32)

    kernel = functools.partial(
        mog_critic_kernel,
        std_scale=float(init_scale) / math.log(2.0),   # softplus(0) == log(2)
        std_lo=std_lo, std_hi=std_hi,
    )

    def run(use_buffered):
        return pl.pallas_call(
            kernel,
            out_shape=out_shape,
            grid=(grid_n,),
            in_specs=make_in_specs(use_buffered),
            out_specs=out_spec,
            compiler_params=pltpu.CompilerParams(
                dimension_semantics=("parallel",),
                vmem_limit_bytes=vmem_limit),
        )(obs, action, *param_args)

    try:
        head = run(True)
    except Exception:
        # fallback if this jax/libtpu rejects pipeline_mode=pl.Buffered(1)
        head = run(False)

    # split the fused slab; torch .unsqueeze(1) -> [B, 1, num_components]
    return {
        "mus": head[:, 0:C][:, None, :],
        "stdevs": head[:, C:2 * C][:, None, :],
        "logits": head[:, 2 * C:3 * C][:, None, :],
    }


def mog_critic_ref(obs, action, raw, init_scale=0.001):
    """Pure-JAX reference mirroring the PyTorch module (LayerNorm branch)."""
    def ln(x, g, b, eps=1e-5):
        m = x.mean(-1, keepdims=True)
        v = ((x - m) ** 2).mean(-1, keepdims=True)
        return (x - m) / jnp.sqrt(v + eps) * g + b

    h = obs @ raw["wt"] + raw["bt"]
    h = ln(h, raw["gt"], raw["bet"])
    x = jnp.concatenate([h, action], axis=-1)
    w1 = jnp.concatenate([raw["w1h"], raw["w1a"]], axis=0)
    x = jax.nn.relu(ln(x @ w1 + raw["b1"], raw["g1"], raw["be1"]))
    x = jax.nn.relu(ln(x @ raw["w2"] + raw["b2"], raw["g2"], raw["be2"]))
    mus = x @ raw["wmu"] + raw["bmu"]
    std = (init_scale * jax.nn.softplus(x @ raw["wsd"] + raw["bsd"])
           / math.log(2.0) + 1e-4)
    lgt = x @ raw["wlg"] + raw["blg"]
    return mus[:, None, :], std[:, None, :], lgt[:, None, :]


if __name__ == "__main__":
    import numpy as np

    # small, module-consistent shapes
    B = 8
    repr_dim, action_dim = 32, 8
    feature_dim, hidden_dim = 32, 32
    num_components = 4
    init_scale = 0.001

    key = jax.random.PRNGKey(0)
    k_obs, k_act, k_par = jax.random.split(key, 3)

    obs = jax.random.normal(k_obs, (B, repr_dim), jnp.float32)
    action = jax.random.uniform(k_act, (B, action_dim), jnp.float32, -1.0, 1.0)
    raw = init_params(k_par, repr_dim, action_dim, feature_dim,
                      hidden_dim, num_components)

    # ---- exact-numerics path (f32 MXU inputs) vs reference -------------------
    p_f32 = prepare_params(raw, weight_dtype=jnp.float32)
    out = mog_critic_forward(obs, action, p_f32, init_scale=init_scale)
    jax.block_until_ready(out)

    assert out["mus"].shape == (B, 1, num_components)
    assert out["stdevs"].shape == (B, 1, num_components)
    assert out["logits"].shape == (B, 1, num_components)
    assert bool(jnp.all(out["stdevs"] > 0.0))

    ref_mus, ref_std, ref_lgt = mog_critic_ref(obs, action, raw, init_scale)
    np.testing.assert_allclose(out["mus"], ref_mus, rtol=1e-4, atol=1e-5)
    np.testing.assert_allclose(out["stdevs"], ref_std, rtol=1e-4, atol=1e-5)
    np.testing.assert_allclose(out["logits"], ref_lgt, rtol=1e-4, atol=1e-5)

    # ---- default path (bf16 MXU inputs, f32 accumulation): looser numerics ---
    p_bf16 = prepare_params(raw)                      # weight_dtype=bf16 default
    out_bf = mog_critic_forward(obs, action, p_bf16, init_scale=init_scale)
    jax.block_until_ready(out_bf)
    assert bool(jnp.all(jnp.isfinite(out_bf["mus"])))
    assert bool(jnp.all(out_bf["stdevs"] > 0.0))
    np.testing.assert_allclose(out_bf["mus"], ref_mus, rtol=0.15, atol=0.05)
    np.testing.assert_allclose(out_bf["stdevs"], ref_std, rtol=0.15, atol=0.05)
    np.testing.assert_allclose(out_bf["logits"], ref_lgt, rtol=0.15, atol=0.05)

    # ---- ragged batch, single partial block (no padding copy) ----------------
    B2 = 13
    obs2 = jax.random.normal(jax.random.PRNGKey(1), (B2, repr_dim), jnp.float32)
    act2 = jax.random.uniform(jax.random.PRNGKey(2), (B2, action_dim),
                              jnp.float32, -1.0, 1.0)
    out2 = mog_critic_forward(obs2, act2, p_f32, init_scale=init_scale)
    jax.block_until_ready(out2)
    r_mus2, r_std2, r_lgt2 = mog_critic_ref(obs2, act2, raw, init_scale)
    np.testing.assert_allclose(out2["mus"], r_mus2, rtol=1e-4, atol=1e-5)
    np.testing.assert_allclose(out2["stdevs"], r_std2, rtol=1e-4, atol=1e-5)

    # ---- ragged batch, grid >= 2 with a partial LAST block --------------------
    B3 = 40
    obs3 = jax.random.normal(jax.random.PRNGKey(3), (B3, repr_dim), jnp.float32)
    act3 = jax.random.uniform(jax.random.PRNGKey(4), (B3, action_dim),
                              jnp.float32, -1.0, 1.0)
    out3 = mog_critic_forward(obs3, act3, p_f32, init_scale=init_scale)
    jax.block_until_ready(out3)
    r_mus3, r_std3, r_lgt3 = mog_critic_ref(obs3, act3, raw, init_scale)
    np.testing.assert_allclose(out3["mus"], r_mus3, rtol=1e-4, atol=1e-5)
    np.testing.assert_allclose(out3["stdevs"], r_std3, rtol=1e-4, atol=1e-5)
    np.testing.assert_allclose(out3["logits"], r_lgt3, rtol=1e-4, atol=1e-5)

    print("KERNEL_OK")
</pallas_src>

<mosaic_0001>
module attributes {stable_mosaic.version = 11 : i64} {
  func.func @mog_critic_kernel(%arg0: i32, %arg1: memref<8x32xf32, #tpu.memory_space<vmem>>, %arg2: memref<8x8xf32, #tpu.memory_space<vmem>>, %arg3: memref<32x32xf32, #tpu.memory_space<vmem>>, %arg4: memref<1x32xf32, #tpu.memory_space<vmem>>, %arg5: memref<1x32xf32, #tpu.memory_space<vmem>>, %arg6: memref<1x32xf32, #tpu.memory_space<vmem>>, %arg7: memref<32x32xf32, #tpu.memory_space<vmem>>, %arg8: memref<8x32xf32, #tpu.memory_space<vmem>>, %arg9: memref<1x32xf32, #tpu.memory_space<vmem>>, %arg10: memref<1x32xf32, #tpu.memory_space<vmem>>, %arg11: memref<1x32xf32, #tpu.memory_space<vmem>>, %arg12: memref<32x32xf32, #tpu.memory_space<vmem>>, %arg13: memref<1x32xf32, #tpu.memory_space<vmem>>, %arg14: memref<1x32xf32, #tpu.memory_space<vmem>>, %arg15: memref<1x32xf32, #tpu.memory_space<vmem>>, %arg16: memref<32x128xf32, #tpu.memory_space<vmem>>, %arg17: memref<1x128xf32, #tpu.memory_space<vmem>>, %arg18: memref<1x128xf32, #tpu.memory_space<vmem>>, %arg19: memref<8x128xf32, #tpu.memory_space<vmem>>) attributes {dimension_semantics = [#tpu.dimension_semantics<parallel>], iteration_bounds = array<i64: 1>, scalar_prefetch = 0 : i64, scratch_operands = 0 : i64, tpu.core_type = #tpu.core_type<tc>, window_params = [{transform_indices = @transform_0, window_bounds = array<i64: 8, 32>}, {transform_indices = @transform_1, window_bounds = array<i64: 8, 8>}, {pipeline_mode = #tpu.pipeline_mode<synchronous>, transform_indices = @transform_2, window_bounds = array<i64: 32, 32>}, {pipeline_mode = #tpu.pipeline_mode<synchronous>, transform_indices = @transform_3, window_bounds = array<i64: 1, 32>}, {pipeline_mode = #tpu.pipeline_mode<synchronous>, transform_indices = @transform_4, window_bounds = array<i64: 1, 32>}, {pipeline_mode = #tpu.pipeline_mode<synchronous>, transform_indices = @transform_5, window_bounds = array<i64: 1, 32>}, {pipeline_mode = #tpu.pipeline_mode<synchronous>, transform_indices = @transform_6, window_bounds = array<i64: 32, 32>}, {pipeline_mode = #tpu.pipeline_mode<synchronous>, transform_indices = @transform_7, window_bounds = array<i64: 8, 32>}, {pipeline_mode = #tpu.pipeline_mode<synchronous>, transform_indices = @transform_8, window_bounds = array<i64: 1, 32>}, {pipeline_mode = #tpu.pipeline_mode<synchronous>, transform_indices = @transform_9, window_bounds = array<i64: 1, 32>}, {pipeline_mode = #tpu.pipeline_mode<synchronous>, transform_indices = @transform_10, window_bounds = array<i64: 1, 32>}, {pipeline_mode = #tpu.pipeline_mode<synchronous>, transform_indices = @transform_11, window_bounds = array<i64: 32, 32>}, {pipeline_mode = #tpu.pipeline_mode<synchronous>, transform_indices = @transform_12, window_bounds = array<i64: 1, 32>}, {pipeline_mode = #tpu.pipeline_mode<synchronous>, transform_indices = @transform_13, window_bounds = array<i64: 1, 32>}, {pipeline_mode = #tpu.pipeline_mode<synchronous>, transform_indices = @transform_14, window_bounds = array<i64: 1, 32>}, {pipeline_mode = #tpu.pipeline_mode<synchronous>, transform_indices = @transform_15, window_bounds = array<i64: 32, 128>}, {pipeline_mode = #tpu.pipeline_mode<synchronous>, transform_indices = @transform_16, window_bounds = array<i64: 1, 128>}, {pipeline_mode = #tpu.pipeline_mode<synchronous>, transform_indices = @transform_17, window_bounds = array<i64: 1, 128>}, {transform_indices = @transform_18, window_bounds = array<i64: 8, 128>}]} {
    %c0 = arith.constant 0 : index
    %c0_0 = arith.constant 0 : index
    %0 = vector.load %arg1[%c0, %c0_0] : memref<8x32xf32, #tpu.memory_space<vmem>>, vector<8x32xf32>
    %c0_1 = arith.constant 0 : index
    %c0_2 = arith.constant 0 : index
    %1 = vector.load %arg2[%c0_1, %c0_2] : memref<8x8xf32, #tpu.memory_space<vmem>>, vector<8x8xf32>
    %c0_3 = arith.constant 0 : index
    %c0_4 = arith.constant 0 : index
    %2 = vector.load %arg3[%c0_3, %c0_4] : memref<32x32xf32, #tpu.memory_space<vmem>>, vector<32x32xf32>
    %cst = arith.constant dense<0.000000e+00> : vector<8x32xf32>
    %3 = tpu.matmul %0, %2, %cst {dimension_numbers = #tpu.dot_dimension_numbers<[1], [0], [0], [1], [0, 0, 1, 1], [], []>} : vector<8x32xf32>, vector<32x32xf32>, vector<8x32xf32> -> vector<8x32xf32>
    %c0_5 = arith.constant 0 : index
    %c0_6 = arith.constant 0 : index
    %4 = vector.load %arg4[%c0_5, %c0_6] : memref<1x32xf32, #tpu.memory_space<vmem>>, vector<1x32xf32>
    %5 = vector.broadcast %4 : vector<1x32xf32> to vector<8x32xf32>
    %6 = arith.addf %3, %5 : vector<8x32xf32>
    %c0_7 = arith.constant 0 : index
    %c0_8 = arith.constant 0 : index
    %7 = vector.load %arg5[%c0_7, %c0_8] : memref<1x32xf32, #tpu.memory_space<vmem>>, vector<1x32xf32>
    %c0_9 = arith.constant 0 : index
    %c0_10 = arith.constant 0 : index
    %8 = vector.load %arg6[%c0_9, %c0_10] : memref<1x32xf32, #tpu.memory_space<vmem>>, vector<1x32xf32>
    %cst_11 = arith.constant dense<0.000000e+00> : vector<8xf32>
    %9 = vector.multi_reduction <add>, %6, %cst_11 [1] : vector<8x32xf32> to vector<8xf32>
    %10 = vector.shape_cast %9 : vector<8xf32> to vector<8x1xf32>
    %cst_12 = arith.constant 3.200000e+01 : f32
    %11 = vector.broadcast %cst_12 : f32 to vector<8x1xf32>
    %12 = arith.divf %10, %11 : vector<8x1xf32>
    %13 = vector.broadcast %12 : vector<8x1xf32> to vector<8x32xf32>
    %14 = arith.subf %6, %13 : vector<8x32xf32>
    %15 = arith.mulf %14, %14 : vector<8x32xf32>
    %cst_13 = arith.constant dense<0.000000e+00> : vector<8xf32>
    %16 = vector.multi_reduction <add>, %15, %cst_13 [1] : vector<8x32xf32> to vector<8xf32>
    %17 = vector.shape_cast %16 : vector<8xf32> to vector<8x1xf32>
    %cst_14 = arith.constant 3.200000e+01 : f32
    %18 = vector.broadcast %cst_14 : f32 to vector<8x1xf32>
    %19 = arith.divf %17, %18 : vector<8x1xf32>
    %20 = vector.broadcast %12 : vector<8x1xf32> to vector<8x32xf32>
    %21 = arith.subf %6, %20 : vector<8x32xf32>
    %cst_15 = arith.constant 9.99999974E-6 : f32
    %22 = vector.broadcast %cst_15 : f32 to vector<8x1xf32>
    %23 = arith.addf %19, %22 : vector<8x1xf32>
    %24 = math.rsqrt %23 : vector<8x1xf32>
    %25 = vector.broadcast %24 : vector<8x1xf32> to vector<8x32xf32>
    %26 = arith.mulf %21, %25 : vector<8x32xf32>
    %27 = vector.broadcast %7 : vector<1x32xf32> to vector<8x32xf32>
    %28 = arith.mulf %26, %27 : vector<8x32xf32>
    %29 = vector.broadcast %8 : vector<1x32xf32> to vector<8x32xf32>
    %30 = arith.addf %28, %29 : vector<8x32xf32>
    %c0_16 = arith.constant 0 : index
    %c0_17 = arith.constant 0 : index
    %31 = vector.load %arg7[%c0_16, %c0_17] : memref<32x32xf32, #tpu.memory_space<vmem>>, vector<32x32xf32>
    %cst_18 = arith.constant dense<0.000000e+00> : vector<8x32xf32>
    %32 = tpu.matmul %30, %31, %cst_18 {dimension_numbers = #tpu.dot_dimension_numbers<[1], [0], [0], [1], [0, 0, 1, 1], [], []>} : vector<8x32xf32>, vector<32x32xf32>, vector<8x32xf32> -> vector<8x32xf32>
    %c0_19 = arith.constant 0 : index
    %c0_20 = arith.constant 0 : index
    %33 = vector.load %arg8[%c0_19, %c0_20] : memref<8x32xf32, #tpu.memory_space<vmem>>, vector<8x32xf32>
    %cst_21 = arith.constant dense<0.000000e+00> : vector<8x32xf32>
    %34 = tpu.matmul %1, %33, %cst_21 {dimension_numbers = #tpu.dot_dimension_numbers<[1], [0], [0], [1], [0, 0, 1, 1], [], []>} : vector<8x8xf32>, vector<8x32xf32>, vector<8x32xf32> -> vector<8x32xf32>
    %35 = arith.addf %32, %34 : vector<8x32xf32>
    %c0_22 = arith.constant 0 : index
    %c0_23 = arith.constant 0 : index
    %36 = vector.load %arg9[%c0_22, %c0_23] : memref<1x32xf32, #tpu.memory_space<vmem>>, vector<1x32xf32>
    %37 = vector.broadcast %36 : vector<1x32xf32> to vector<8x32xf32>
    %38 = arith.addf %35, %37 : vector<8x32xf32>
    %c0_24 = arith.constant 0 : index
    %c0_25 = arith.constant 0 : index
    %39 = vector.load %arg10[%c0_24, %c0_25] : memref<1x32xf32, #tpu.memory_space<vmem>>, vector<1x32xf32>
    %c0_26 = arith.constant 0 : index
    %c0_27 = arith.constant 0 : index
    %40 = vector.load %arg11[%c0_26, %c0_27] : memref<1x32xf32, #tpu.memory_space<vmem>>, vector<1x32xf32>
    %cst_28 = arith.constant dense<0.000000e+00> : vector<8xf32>
    %41 = vector.multi_reduction <add>, %38, %cst_28 [1] : vector<8x32xf32> to vector<8xf32>
    %42 = vector.shape_cast %41 : vector<8xf32> to vector<8x1xf32>
    %cst_29 = arith.constant 3.200000e+01 : f32
    %43 = vector.broadcast %cst_29 : f32 to vector<8x1xf32>
    %44 = arith.divf %42, %43 : vector<8x1xf32>
    %45 = vector.broadcast %44 : vector<8x1xf32> to vector<8x32xf32>
    %46 = arith.subf %38, %45 : vector<8x32xf32>
    %47 = arith.mulf %46, %46 : vector<8x32xf32>
    %cst_30 = arith.constant dense<0.000000e+00> : vector<8xf32>
    %48 = vector.multi_reduction <add>, %47, %cst_30 [1] : vector<8x32xf32> to vector<8xf32>
    %49 = vector.shape_cast %48 : vector<8xf32> to vector<8x1xf32>
    %cst_31 = arith.constant 3.200000e+01 : f32
    %50 = vector.broadcast %cst_31 : f32 to vector<8x1xf32>
    %51 = arith.divf %49, %50 : vector<8x1xf32>
    %52 = vector.broadcast %44 : vector<8x1xf32> to vector<8x32xf32>
    %53 = arith.subf %38, %52 : vector<8x32xf32>
    %cst_32 = arith.constant 9.99999974E-6 : f32
    %54 = vector.broadcast %cst_32 : f32 to vector<8x1xf32>
    %55 = arith.addf %51, %54 : vector<8x1xf32>
    %56 = math.rsqrt %55 : vector<8x1xf32>
    %57 = vector.broadcast %56 : vector<8x1xf32> to vector<8x32xf32>
    %58 = arith.mulf %53, %57 : vector<8x32xf32>
    %59 = vector.broadcast %39 : vector<1x32xf32> to vector<8x32xf32>
    %60 = arith.mulf %58, %59 : vector<8x32xf32>
    %61 = vector.broadcast %40 : vector<1x32xf32> to vector<8x32xf32>
    %62 = arith.addf %60, %61 : vector<8x32xf32>
    %cst_33 = arith.constant 0.000000e+00 : f32
    %63 = vector.broadcast %cst_33 : f32 to vector<8x32xf32>
    %64 = arith.maximumf %62, %63 : vector<8x32xf32>
    %c0_34 = arith.constant 0 : index
    %c0_35 = arith.constant 0 : index
    %65 = vector.load %arg12[%c0_34, %c0_35] : memref<32x32xf32, #tpu.memory_space<vmem>>, vector<32x32xf32>
    %cst_36 = arith.constant dense<0.000000e+00> : vector<8x32xf32>
    %66 = tpu.matmul %64, %65, %cst_36 {dimension_numbers = #tpu.dot_dimension_numbers<[1], [0], [0], [1], [0, 0, 1, 1], [], []>} : vector<8x32xf32>, vector<32x32xf32>, vector<8x32xf32> -> vector<8x32xf32>
    %c0_37 = arith.constant 0 : index
    %c0_38 = arith.constant 0 : index
    %67 = vector.load %arg13[%c0_37, %c0_38] : memref<1x32xf32, #tpu.memory_space<vmem>>, vector<1x32xf32>
    %68 = vector.broadcast %67 : vector<1x32xf32> to vector<8x32xf32>
    %69 = arith.addf %66, %68 : vector<8x32xf32>
    %c0_39 = arith.constant 0 : index
    %c0_40 = arith.constant 0 : index
    %70 = vector.load %arg14[%c0_39, %c0_40] : memref<1x32xf32, #tpu.memory_space<vmem>>, vector<1x32xf32>
    %c0_41 = arith.constant 0 : index
    %c0_42 = arith.constant 0 : index
    %71 = vector.load %arg15[%c0_41, %c0_42] : memref<1x32xf32, #tpu.memory_space<vmem>>, vector<1x32xf32>
    %cst_43 = arith.constant dense<0.000000e+00> : vector<8xf32>
    %72 = vector.multi_reduction <add>, %69, %cst_43 [1] : vector<8x32xf32> to vector<8xf32>
    %73 = vector.shape_cast %72 : vector<8xf32> to vector<8x1xf32>
    %cst_44 = arith.constant 3.200000e+01 : f32
    %74 = vector.broadcast %cst_44 : f32 to vector<8x1xf32>
    %75 = arith.divf %73, %74 : vector<8x1xf32>
    %76 = vector.broadcast %75 : vector<8x1xf32> to vector<8x32xf32>
    %77 = arith.subf %69, %76 : vector<8x32xf32>
    %78 = arith.mulf %77, %77 : vector<8x32xf32>
    %cst_45 = arith.constant dense<0.000000e+00> : vector<8xf32>
    %79 = vector.multi_reduction <add>, %78, %cst_45 [1] : vector<8x32xf32> to vector<8xf32>
    %80 = vector.shape_cast %79 : vector<8xf32> to vector<8x1xf32>
    %cst_46 = arith.constant 3.200000e+01 : f32
    %81 = vector.broadcast %cst_46 : f32 to vector<8x1xf32>
    %82 = arith.divf %80, %81 : vector<8x1xf32>
    %83 = vector.broadcast %75 : vector<8x1xf32> to vector<8x32xf32>
    %84 = arith.subf %69, %83 : vector<8x32xf32>
    %cst_47 = arith.constant 9.99999974E-6 : f32
    %85 = vector.broadcast %cst_47 : f32 to vector<8x1xf32>
    %86 = arith.addf %82, %85 : vector<8x1xf32>
    %87 = math.rsqrt %86 : vector<8x1xf32>
    %88 = vector.broadcast %87 : vector<8x1xf32> to vector<8x32xf32>
    %89 = arith.mulf %84, %88 : vector<8x32xf32>
    %90 = vector.broadcast %70 : vector<1x32xf32> to vector<8x32xf32>
    %91 = arith.mulf %89, %90 : vector<8x32xf32>
    %92 = vector.broadcast %71 : vector<1x32xf32> to vector<8x32xf32>
    %93 = arith.addf %91, %92 : vector<8x32xf32>
    %cst_48 = arith.constant 0.000000e+00 : f32
    %94 = vector.broadcast %cst_48 : f32 to vector<8x32xf32>
    %95 = arith.maximumf %93, %94 : vector<8x32xf32>
    %c0_49 = arith.constant 0 : index
    %c0_50 = arith.constant 0 : index
    %96 = vector.load %arg16[%c0_49, %c0_50] : memref<32x128xf32, #tpu.memory_space<vmem>>, vector<32x128xf32>
    %cst_51 = arith.constant dense<0.000000e+00> : vector<8x128xf32>
    %97 = tpu.matmul %95, %96, %cst_51 {dimension_numbers = #tpu.dot_dimension_numbers<[1], [0], [0], [1], [0, 0, 1, 1], [], []>} : vector<8x32xf32>, vector<32x128xf32>, vector<8x128xf32> -> vector<8x128xf32>
    %c0_52 = arith.constant 0 : index
    %c0_53 = arith.constant 0 : index
    %98 = vector.load %arg17[%c0_52, %c0_53] : memref<1x128xf32, #tpu.memory_space<vmem>>, vector<1x128xf32>
    %99 = vector.broadcast %98 : vector<1x128xf32> to vector<8x128xf32>
    %100 = arith.addf %97, %99 : vector<8x128xf32>
    %c0_54 = arith.constant 0 : index
    %c0_55 = arith.constant 0 : index
    %101 = vector.load %arg18[%c0_54, %c0_55] : memref<1x128xf32, #tpu.memory_space<vmem>>, vector<1x128xf32>
    %cst_56 = arith.constant 0.000000e+00 : f32
    %102 = vector.broadcast %cst_56 : f32 to vector<1x128xf32>
    %103 = arith.cmpf ogt, %101, %102 : vector<1x128xf32>
    %cst_57 = arith.constant 0.000000e+00 : f32
    %104 = vector.broadcast %cst_57 : f32 to vector<8x128xf32>
    %105 = arith.maximumf %100, %104 : vector<8x128xf32>
    %106 = vector.broadcast %cst_57 : f32 to vector<8x128xf32>
    %107 = arith.subf %100, %106 : vector<8x128xf32>
    %108 = arith.cmpf one, %107, %107 : vector<8x128xf32>
    %109 = vector.broadcast %cst_57 : f32 to vector<8x128xf32>
    %110 = arith.addf %100, %109 : vector<8x128xf32>
    %111 = math.absf %107 : vector<8x128xf32>
    %cst_58 = arith.constant 0.000000e+00 : f32
    %112 = vector.broadcast %cst_58 : f32 to vector<8x128xf32>
    %113 = arith.subf %112, %111 : vector<8x128xf32>
    %114 = math.exp %113 : vector<8x128xf32>
    %115 = math.log1p %114 : vector<8x128xf32>
    %116 = arith.addf %105, %115 : vector<8x128xf32>
    %117 = arith.select %108, %110, %116 : vector<8x128xi1>, vector<8x128xf32>
    %cst_59 = arith.constant 0.00144269504 : f32
    %118 = vector.broadcast %cst_59 : f32 to vector<8x128xf32>
    %119 = arith.mulf %118, %117 : vector<8x128xf32>
    %cst_60 = arith.constant 9.99999974E-5 : f32
    %120 = vector.broadcast %cst_60 : f32 to vector<8x128xf32>
    %121 = arith.addf %119, %120 : vector<8x128xf32>
    %122 = vector.shape_cast %103 : vector<1x128xi1> to vector<1x128xi1>
    %123 = vector.broadcast %122 : vector<1x128xi1> to vector<8x128xi1>
    %124 = arith.select %123, %121, %100 : vector<8x128xi1>, vector<8x128xf32>
    %c0_61 = arith.constant 0 : index
    %c0_62 = arith.constant 0 : index
    %125 = vector.load %arg19[%c0_61, %c0_62] : memref<8x128xf32, #tpu.memory_space<vmem>>, vector<8x128xf32>
    tpu.vector_store %arg19[%c0_61, %c0_62], %124 {strides = array<i32>} : memref<8x128xf32, #tpu.memory_space<vmem>>, vector<8x128xf32>,
    return
  }
  func.func @transform_0(%arg0: i32) -> (i32, i32) {
    %c0_i32 = arith.constant 0 : i32
    %c0_i32_0 = arith.constant 0 : i32
    return %arg0, %c0_i32 : i32, i32
  }
  func.func @transform_1(%arg0: i32) -> (i32, i32) {
    %c0_i32 = arith.constant 0 : i32
    %c0_i32_0 = arith.constant 0 : i32
    return %arg0, %c0_i32 : i32, i32
  }
  func.func @transform_2(%arg0: i32) -> (i32, i32) {
    %c0_i32 = arith.constant 0 : i32
    %c0_i32_0 = arith.constant 0 : i32
    %c0_i32_1 = arith.constant 0 : i32
    return %c0_i32, %c0_i32_0 : i32, i32
  }
  func.func @transform_3(%arg0: i32) -> (i32, i32) {
    %c0_i32 = arith.constant 0 : i32
    %c0_i32_0 = arith.constant 0 : i32
    %c0_i32_1 = arith.constant 0 : i32
    return %c0_i32, %c0_i32_0 : i32, i32
  }
  func.func @transform_4(%arg0: i32) -> (i32, i32) {
    %c0_i32 = arith.constant 0 : i32
    %c0_i32_0 = arith.constant 0 : i32
    %c0_i32_1 = arith.constant 0 : i32
    return %c0_i32, %c0_i32_0 : i32, i32
  }
  func.func @transform_5(%arg0: i32) -> (i32, i32) {
    %c0_i32 = arith.constant 0 : i32
    %c0_i32_0 = arith.constant 0 : i32
    %c0_i32_1 = arith.constant 0 : i32
    return %c0_i32, %c0_i32_0 : i32, i32
  }
  func.func @transform_6(%arg0: i32) -> (i32, i32) {
    %c0_i32 = arith.constant 0 : i32
    %c0_i32_0 = arith.constant 0 : i32
    %c0_i32_1 = arith.constant 0 : i32
    return %c0_i32, %c0_i32_0 : i32, i32
  }
  func.func @transform_7(%arg0: i32) -> (i32, i32) {
    %c0_i32 = arith.constant 0 : i32
    %c0_i32_0 = arith.constant 0 : i32
    %c0_i32_1 = arith.constant 0 : i32
    return %c0_i32, %c0_i32_0 : i32, i32
  }
  func.func @transform_8(%arg0: i32) -> (i32, i32) {
    %c0_i32 = arith.constant 0 : i32
    %c0_i32_0 = arith.constant 0 : i32
    %c0_i32_1 = arith.constant 0 : i32
    return %c0_i32, %c0_i32_0 : i32, i32
  }
  func.func @transform_9(%arg0: i32) -> (i32, i32) {
    %c0_i32 = arith.constant 0 : i32
    %c0_i32_0 = arith.constant 0 : i32
    %c0_i32_1 = arith.constant 0 : i32
    return %c0_i32, %c0_i32_0 : i32, i32
  }
  func.func @transform_10(%arg0: i32) -> (i32, i32) {
    %c0_i32 = arith.constant 0 : i32
    %c0_i32_0 = arith.constant 0 : i32
    %c0_i32_1 = arith.constant 0 : i32
    return %c0_i32, %c0_i32_0 : i32, i32
  }
  func.func @transform_11(%arg0: i32) -> (i32, i32) {
    %c0_i32 = arith.constant 0 : i32
    %c0_i32_0 = arith.constant 0 : i32
    %c0_i32_1 = arith.constant 0 : i32
    return %c0_i32, %c0_i32_0 : i32, i32
  }
  func.func @transform_12(%arg0: i32) -> (i32, i32) {
    %c0_i32 = arith.constant 0 : i32
    %c0_i32_0 = arith.constant 0 : i32
    %c0_i32_1 = arith.constant 0 : i32
    return %c0_i32, %c0_i32_0 : i32, i32
  }
  func.func @transform_13(%arg0: i32) -> (i32, i32) {
    %c0_i32 = arith.constant 0 : i32
    %c0_i32_0 = arith.constant 0 : i32
    %c0_i32_1 = arith.constant 0 : i32
    return %c0_i32, %c0_i32_0 : i32, i32
  }
  func.func @transform_14(%arg0: i32) -> (i32, i32) {
    %c0_i32 = arith.constant 0 : i32
    %c0_i32_0 = arith.constant 0 : i32
    %c0_i32_1 = arith.constant 0 : i32
    return %c0_i32, %c0_i32_0 : i32, i32
  }
  func.func @transform_15(%arg0: i32) -> (i32, i32) {
    %c0_i32 = arith.constant 0 : i32
    %c0_i32_0 = arith.constant 0 : i32
    %c0_i32_1 = arith.constant 0 : i32
    return %c0_i32, %c0_i32_0 : i32, i32
  }
  func.func @transform_16(%arg0: i32) -> (i32, i32) {
    %c0_i32 = arith.constant 0 : i32
    %c0_i32_0 = arith.constant 0 : i32
    %c0_i32_1 = arith.constant 0 : i32
    return %c0_i32, %c0_i32_0 : i32, i32
  }
  func.func @transform_17(%arg0: i32) -> (i32, i32) {
    %c0_i32 = arith.constant 0 : i32
    %c0_i32_0 = arith.constant 0 : i32
    %c0_i32_1 = arith.constant 0 : i32
    return %c0_i32, %c0_i32_0 : i32, i32
  }
  func.func @transform_18(%arg0: i32) -> (i32, i32) {
    %c0_i32 = arith.constant 0 : i32
    %c0_i32_0 = arith.constant 0 : i32
    return %arg0, %c0_i32 : i32, i32
  }
}

module attributes {stable_mosaic.version = 11 : i64} {
  func.func @mog_critic_kernel(%arg0: i32, %arg1: memref<8x32xf32, #tpu.memory_space<vmem>>, %arg2: memref<8x8xf32, #tpu.memory_space<vmem>>, %arg3: memref<32x32xf32, #tpu.memory_space<vmem>>, %arg4: memref<1x32xf32, #tpu.memory_space<vmem>>, %arg5: memref<1x32xf32, #tpu.memory_space<vmem>>, %arg6: memref<1x32xf32, #tpu.memory_space<vmem>>, %arg7: memref<32x32xf32, #tpu.memory_space<vmem>>, %arg8: memref<8x32xf32, #tpu.memory_space<vmem>>, %arg9: memref<1x32xf32, #tpu.memory_space<vmem>>, %arg10: memref<1x32xf32, #tpu.memory_space<vmem>>, %arg11: memref<1x32xf32, #tpu.memory_space<vmem>>, %arg12: memref<32x32xf32, #tpu.memory_space<vmem>>, %arg13: memref<1x32xf32, #tpu.memory_space<vmem>>, %arg14: memref<1x32xf32, #tpu.memory_space<vmem>>, %arg15: memref<1x32xf32, #tpu.memory_space<vmem>>, %arg16: memref<32x128xf32, #tpu.memory_space<vmem>>, %arg17: memref<1x128xf32, #tpu.memory_space<vmem>>, %arg18: memref<1x128xf32, #tpu.memory_space<vmem>>, %arg19: memref<8x128xf32, #tpu.memory_space<vmem>>) attributes {dimension_semantics = [#tpu.dimension_semantics<parallel>], iteration_bounds = array<i64: 1>, scalar_prefetch = 0 : i64, scratch_operands = 0 : i64, tpu.core_type = #tpu.core_type<tc>, window_params = [{transform_indices = @transform_0, window_bounds = array<i64: 8, 32>}, {transform_indices = @transform_1, window_bounds = array<i64: 8, 8>}, {pipeline_mode = #tpu.pipeline_mode<synchronous>, transform_indices = @transform_2, window_bounds = array<i64: 32, 32>}, {pipeline_mode = #tpu.pipeline_mode<synchronous>, transform_indices = @transform_3, window_bounds = array<i64: 1, 32>}, {pipeline_mode = #tpu.pipeline_mode<synchronous>, transform_indices = @transform_4, window_bounds = array<i64: 1, 32>}, {pipeline_mode = #tpu.pipeline_mode<synchronous>, transform_indices = @transform_5, window_bounds = array<i64: 1, 32>}, {pipeline_mode = #tpu.pipeline_mode<synchronous>, transform_indices = @transform_6, window_bounds = array<i64: 32, 32>}, {pipeline_mode = #tpu.pipeline_mode<synchronous>, transform_indices = @transform_7, window_bounds = array<i64: 8, 32>}, {pipeline_mode = #tpu.pipeline_mode<synchronous>, transform_indices = @transform_8, window_bounds = array<i64: 1, 32>}, {pipeline_mode = #tpu.pipeline_mode<synchronous>, transform_indices = @transform_9, window_bounds = array<i64: 1, 32>}, {pipeline_mode = #tpu.pipeline_mode<synchronous>, transform_indices = @transform_10, window_bounds = array<i64: 1, 32>}, {pipeline_mode = #tpu.pipeline_mode<synchronous>, transform_indices = @transform_11, window_bounds = array<i64: 32, 32>}, {pipeline_mode = #tpu.pipeline_mode<synchronous>, transform_indices = @transform_12, window_bounds = array<i64: 1, 32>}, {pipeline_mode = #tpu.pipeline_mode<synchronous>, transform_indices = @transform_13, window_bounds = array<i64: 1, 32>}, {pipeline_mode = #tpu.pipeline_mode<synchronous>, transform_indices = @transform_14, window_bounds = array<i64: 1, 32>}, {pipeline_mode = #tpu.pipeline_mode<synchronous>, transform_indices = @transform_15, window_bounds = array<i64: 32, 128>}, {pipeline_mode = #tpu.pipeline_mode<synchronous>, transform_indices = @transform_16, window_bounds = array<i64: 1, 128>}, {pipeline_mode = #tpu.pipeline_mode<synchronous>, transform_indices = @transform_17, window_bounds = array<i64: 1, 128>}, {transform_indices = @transform_18, window_bounds = array<i64: 8, 128>}]} {
    %c0 = arith.constant 0 : index
    %c0_0 = arith.constant 0 : index
    %0 = vector.load %arg1[%c0, %c0_0] : memref<8x32xf32, #tpu.memory_space<vmem>>, vector<8x32xf32>
    %c0_1 = arith.constant 0 : index
    %c0_2 = arith.constant 0 : index
    %1 = vector.load %arg2[%c0_1, %c0_2] : memref<8x8xf32, #tpu.memory_space<vmem>>, vector<8x8xf32>
    %c0_3 = arith.constant 0 : index
    %c0_4 = arith.constant 0 : index
    %2 = vector.load %arg3[%c0_3, %c0_4] : memref<32x32xf32, #tpu.memory_space<vmem>>, vector<32x32xf32>
    %cst = arith.constant dense<0.000000e+00> : vector<8x32xf32>
    %3 = tpu.matmul %0, %2, %cst {dimension_numbers = #tpu.dot_dimension_numbers<[1], [0], [0], [1], [0, 0, 1, 1], [], []>} : vector<8x32xf32>, vector<32x32xf32>, vector<8x32xf32> -> vector<8x32xf32>
    %c0_5 = arith.constant 0 : index
    %c0_6 = arith.constant 0 : index
    %4 = vector.load %arg4[%c0_5, %c0_6] : memref<1x32xf32, #tpu.memory_space<vmem>>, vector<1x32xf32>
    %5 = vector.broadcast %4 : vector<1x32xf32> to vector<8x32xf32>
    %6 = arith.addf %3, %5 : vector<8x32xf32>
    %c0_7 = arith.constant 0 : index
    %c0_8 = arith.constant 0 : index
    %7 = vector.load %arg5[%c0_7, %c0_8] : memref<1x32xf32, #tpu.memory_space<vmem>>, vector<1x32xf32>
    %c0_9 = arith.constant 0 : index
    %c0_10 = arith.constant 0 : index
    %8 = vector.load %arg6[%c0_9, %c0_10] : memref<1x32xf32, #tpu.memory_space<vmem>>, vector<1x32xf32>
    %cst_11 = arith.constant dense<0.000000e+00> : vector<8xf32>
    %9 = vector.multi_reduction <add>, %6, %cst_11 [1] : vector<8x32xf32> to vector<8xf32>
    %10 = vector.shape_cast %9 : vector<8xf32> to vector<8x1xf32>
    %cst_12 = arith.constant 3.200000e+01 : f32
    %11 = vector.broadcast %cst_12 : f32 to vector<8x1xf32>
    %12 = arith.divf %10, %11 : vector<8x1xf32>
    %13 = vector.broadcast %12 : vector<8x1xf32> to vector<8x32xf32>
    %14 = arith.subf %6, %13 : vector<8x32xf32>
    %15 = arith.mulf %14, %14 : vector<8x32xf32>
    %cst_13 = arith.constant dense<0.000000e+00> : vector<8xf32>
    %16 = vector.multi_reduction <add>, %15, %cst_13 [1] : vector<8x32xf32> to vector<8xf32>
    %17 = vector.shape_cast %16 : vector<8xf32> to vector<8x1xf32>
    %cst_14 = arith.constant 3.200000e+01 : f32
    %18 = vector.broadcast %cst_14 : f32 to vector<8x1xf32>
    %19 = arith.divf %17, %18 : vector<8x1xf32>
    %20 = vector.broadcast %12 : vector<8x1xf32> to vector<8x32xf32>
    %21 = arith.subf %6, %20 : vector<8x32xf32>
    %cst_15 = arith.constant 9.99999974E-6 : f32
    %22 = vector.broadcast %cst_15 : f32 to vector<8x1xf32>
    %23 = arith.addf %19, %22 : vector<8x1xf32>
    %24 = math.rsqrt %23 : vector<8x1xf32>
    %25 = vector.broadcast %24 : vector<8x1xf32> to vector<8x32xf32>
    %26 = arith.mulf %21, %25 : vector<8x32xf32>
    %27 = vector.broadcast %7 : vector<1x32xf32> to vector<8x32xf32>
    %28 = arith.mulf %26, %27 : vector<8x32xf32>
    %29 = vector.broadcast %8 : vector<1x32xf32> to vector<8x32xf32>
    %30 = arith.addf %28, %29 : vector<8x32xf32>
    %c0_16 = arith.constant 0 : index
    %c0_17 = arith.constant 0 : index
    %31 = vector.load %arg7[%c0_16, %c0_17] : memref<32x32xf32, #tpu.memory_space<vmem>>, vector<32x32xf32>
    %cst_18 = arith.constant dense<0.000000e+00> : vector<8x32xf32>
    %32 = tpu.matmul %30, %31, %cst_18 {dimension_numbers = #tpu.dot_dimension_numbers<[1], [0], [0], [1], [0, 0, 1, 1], [], []>} : vector<8x32xf32>, vector<32x32xf32>, vector<8x32xf32> -> vector<8x32xf32>
    %c0_19 = arith.constant 0 : index
    %c0_20 = arith.constant 0 : index
    %33 = vector.load %arg8[%c0_19, %c0_20] : memref<8x32xf32, #tpu.memory_space<vmem>>, vector<8x32xf32>
    %cst_21 = arith.constant dense<0.000000e+00> : vector<8x32xf32>
    %34 = tpu.matmul %1, %33, %cst_21 {dimension_numbers = #tpu.dot_dimension_numbers<[1], [0], [0], [1], [0, 0, 1, 1], [], []>} : vector<8x8xf32>, vector<8x32xf32>, vector<8x32xf32> -> vector<8x32xf32>
    %35 = arith.addf %32, %34 : vector<8x32xf32>
    %c0_22 = arith.constant 0 : index
    %c0_23 = arith.constant 0 : index
    %36 = vector.load %arg9[%c0_22, %c0_23] : memref<1x32xf32, #tpu.memory_space<vmem>>, vector<1x32xf32>
    %37 = vector.broadcast %36 : vector<1x32xf32> to vector<8x32xf32>
    %38 = arith.addf %35, %37 : vector<8x32xf32>
    %c0_24 = arith.constant 0 : index
    %c0_25 = arith.constant 0 : index
    %39 = vector.load %arg10[%c0_24, %c0_25] : memref<1x32xf32, #tpu.memory_space<vmem>>, vector<1x32xf32>
    %c0_26 = arith.constant 0 : index
    %c0_27 = arith.constant 0 : index
    %40 = vector.load %arg11[%c0_26, %c0_27] : memref<1x32xf32, #tpu.memory_space<vmem>>, vector<1x32xf32>
    %cst_28 = arith.constant dense<0.000000e+00> : vector<8xf32>
    %41 = vector.multi_reduction <add>, %38, %cst_28 [1] : vector<8x32xf32> to vector<8xf32>
    %42 = vector.shape_cast %41 : vector<8xf32> to vector<8x1xf32>
    %cst_29 = arith.constant 3.200000e+01 : f32
    %43 = vector.broadcast %cst_29 : f32 to vector<8x1xf32>
    %44 = arith.divf %42, %43 : vector<8x1xf32>
    %45 = vector.broadcast %44 : vector<8x1xf32> to vector<8x32xf32>
    %46 = arith.subf %38, %45 : vector<8x32xf32>
    %47 = arith.mulf %46, %46 : vector<8x32xf32>
    %cst_30 = arith.constant dense<0.000000e+00> : vector<8xf32>
    %48 = vector.multi_reduction <add>, %47, %cst_30 [1] : vector<8x32xf32> to vector<8xf32>
    %49 = vector.shape_cast %48 : vector<8xf32> to vector<8x1xf32>
    %cst_31 = arith.constant 3.200000e+01 : f32
    %50 = vector.broadcast %cst_31 : f32 to vector<8x1xf32>
    %51 = arith.divf %49, %50 : vector<8x1xf32>
    %52 = vector.broadcast %44 : vector<8x1xf32> to vector<8x32xf32>
    %53 = arith.subf %38, %52 : vector<8x32xf32>
    %cst_32 = arith.constant 9.99999974E-6 : f32
    %54 = vector.broadcast %cst_32 : f32 to vector<8x1xf32>
    %55 = arith.addf %51, %54 : vector<8x1xf32>
    %56 = math.rsqrt %55 : vector<8x1xf32>
    %57 = vector.broadcast %56 : vector<8x1xf32> to vector<8x32xf32>
    %58 = arith.mulf %53, %57 : vector<8x32xf32>
    %59 = vector.broadcast %39 : vector<1x32xf32> to vector<8x32xf32>
    %60 = arith.mulf %58, %59 : vector<8x32xf32>
    %61 = vector.broadcast %40 : vector<1x32xf32> to vector<8x32xf32>
    %62 = arith.addf %60, %61 : vector<8x32xf32>
    %cst_33 = arith.constant 0.000000e+00 : f32
    %63 = vector.broadcast %cst_33 : f32 to vector<8x32xf32>
    %64 = arith.maximumf %62, %63 : vector<8x32xf32>
    %c0_34 = arith.constant 0 : index
    %c0_35 = arith.constant 0 : index
    %65 = vector.load %arg12[%c0_34, %c0_35] : memref<32x32xf32, #tpu.memory_space<vmem>>, vector<32x32xf32>
    %cst_36 = arith.constant dense<0.000000e+00> : vector<8x32xf32>
    %66 = tpu.matmul %64, %65, %cst_36 {dimension_numbers = #tpu.dot_dimension_numbers<[1], [0], [0], [1], [0, 0, 1, 1], [], []>} : vector<8x32xf32>, vector<32x32xf32>, vector<8x32xf32> -> vector<8x32xf32>
    %c0_37 = arith.constant 0 : index
    %c0_38 = arith.constant 0 : index
    %67 = vector.load %arg13[%c0_37, %c0_38] : memref<1x32xf32, #tpu.memory_space<vmem>>, vector<1x32xf32>
    %68 = vector.broadcast %67 : vector<1x32xf32> to vector<8x32xf32>
    %69 = arith.addf %66, %68 : vector<8x32xf32>
    %c0_39 = arith.constant 0 : index
    %c0_40 = arith.constant 0 : index
    %70 = vector.load %arg14[%c0_39, %c0_40] : memref<1x32xf32, #tpu.memory_space<vmem>>, vector<1x32xf32>
    %c0_41 = arith.constant 0 : index
    %c0_42 = arith.constant 0 : index
    %71 = vector.load %arg15[%c0_41, %c0_42] : memref<1x32xf32, #tpu.memory_space<vmem>>, vector<1x32xf32>
    %cst_43 = arith.constant dense<0.000000e+00> : vector<8xf32>
    %72 = vector.multi_reduction <add>, %69, %cst_43 [1] : vector<8x32xf32> to vector<8xf32>
    %73 = vector.shape_cast %72 : vector<8xf32> to vector<8x1xf32>
    %cst_44 = arith.constant 3.200000e+01 : f32
    %74 = vector.broadcast %cst_44 : f32 to vector<8x1xf32>
    %75 = arith.divf %73, %74 : vector<8x1xf32>
    %76 = vector.broadcast %75 : vector<8x1xf32> to vector<8x32xf32>
    %77 = arith.subf %69, %76 : vector<8x32xf32>
    %78 = arith.mulf %77, %77 : vector<8x32xf32>
    %cst_45 = arith.constant dense<0.000000e+00> : vector<8xf32>
    %79 = vector.multi_reduction <add>, %78, %cst_45 [1] : vector<8x32xf32> to vector<8xf32>
    %80 = vector.shape_cast %79 : vector<8xf32> to vector<8x1xf32>
    %cst_46 = arith.constant 3.200000e+01 : f32
    %81 = vector.broadcast %cst_46 : f32 to vector<8x1xf32>
    %82 = arith.divf %80, %81 : vector<8x1xf32>
    %83 = vector.broadcast %75 : vector<8x1xf32> to vector<8x32xf32>
    %84 = arith.subf %69, %83 : vector<8x32xf32>
    %cst_47 = arith.constant 9.99999974E-6 : f32
    %85 = vector.broadcast %cst_47 : f32 to vector<8x1xf32>
    %86 = arith.addf %82, %85 : vector<8x1xf32>
    %87 = math.rsqrt %86 : vector<8x1xf32>
    %88 = vector.broadcast %87 : vector<8x1xf32> to vector<8x32xf32>
    %89 = arith.mulf %84, %88 : vector<8x32xf32>
    %90 = vector.broadcast %70 : vector<1x32xf32> to vector<8x32xf32>
    %91 = arith.mulf %89, %90 : vector<8x32xf32>
    %92 = vector.broadcast %71 : vector<1x32xf32> to vector<8x32xf32>
    %93 = arith.addf %91, %92 : vector<8x32xf32>
    %cst_48 = arith.constant 0.000000e+00 : f32
    %94 = vector.broadcast %cst_48 : f32 to vector<8x32xf32>
    %95 = arith.maximumf %93, %94 : vector<8x32xf32>
    %c0_49 = arith.constant 0 : index
    %c0_50 = arith.constant 0 : index
    %96 = vector.load %arg16[%c0_49, %c0_50] : memref<32x128xf32, #tpu.memory_space<vmem>>, vector<32x128xf32>
    %cst_51 = arith.constant dense<0.000000e+00> : vector<8x128xf32>
    %97 = tpu.matmul %95, %96, %cst_51 {dimension_numbers = #tpu.dot_dimension_numbers<[1], [0], [0], [1], [0, 0, 1, 1], [], []>} : vector<8x32xf32>, vector<32x128xf32>, vector<8x128xf32> -> vector<8x128xf32>
    %c0_52 = arith.constant 0 : index
    %c0_53 = arith.constant 0 : index
    %98 = vector.load %arg17[%c0_52, %c0_53] : memref<1x128xf32, #tpu.memory_space<vmem>>, vector<1x128xf32>
    %99 = vector.broadcast %98 : vector<1x128xf32> to vector<8x128xf32>
    %100 = arith.addf %97, %99 : vector<8x128xf32>
    %c0_54 = arith.constant 0 : index
    %c0_55 = arith.constant 0 : index
    %101 = vector.load %arg18[%c0_54, %c0_55] : memref<1x128xf32, #tpu.memory_space<vmem>>, vector<1x128xf32>
    %cst_56 = arith.constant 0.000000e+00 : f32
    %102 = vector.broadcast %cst_56 : f32 to vector<1x128xf32>
    %103 = arith.cmpf ogt, %101, %102 : vector<1x128xf32>
    %cst_57 = arith.constant 0.000000e+00 : f32
    %104 = vector.broadcast %cst_57 : f32 to vector<8x128xf32>
    %105 = arith.maximumf %100, %104 : vector<8x128xf32>
    %106 = vector.broadcast %cst_57 : f32 to vector<8x128xf32>
    %107 = arith.subf %100, %106 : vector<8x128xf32>
    %108 = arith.cmpf one, %107, %107 : vector<8x128xf32>
    %109 = vector.broadcast %cst_57 : f32 to vector<8x128xf32>
    %110 = arith.addf %100, %109 : vector<8x128xf32>
    %111 = math.absf %107 : vector<8x128xf32>
    %cst_58 = arith.constant 0.000000e+00 : f32
    %112 = vector.broadcast %cst_58 : f32 to vector<8x128xf32>
    %113 = arith.subf %112, %111 : vector<8x128xf32>
    %114 = math.exp %113 : vector<8x128xf32>
    %115 = math.log1p %114 : vector<8x128xf32>
    %116 = arith.addf %105, %115 : vector<8x128xf32>
    %117 = arith.select %108, %110, %116 : vector<8x128xi1>, vector<8x128xf32>
    %cst_59 = arith.constant 0.00144269504 : f32
    %118 = vector.broadcast %cst_59 : f32 to vector<8x128xf32>
    %119 = arith.mulf %118, %117 : vector<8x128xf32>
    %cst_60 = arith.constant 9.99999974E-5 : f32
    %120 = vector.broadcast %cst_60 : f32 to vector<8x128xf32>
    %121 = arith.addf %119, %120 : vector<8x128xf32>
    %122 = vector.shape_cast %103 : vector<1x128xi1> to vector<1x128xi1>
    %123 = vector.broadcast %122 : vector<1x128xi1> to vector<8x128xi1>
    %124 = arith.select %123, %121, %100 : vector<8x128xi1>, vector<8x128xf32>
    %c0_61 = arith.constant 0 : index
    %c0_62 = arith.constant 0 : index
    %125 = vector.load %arg19[%c0_61, %c0_62] : memref<8x128xf32, #tpu.memory_space<vmem>>, vector<8x128xf32>
    tpu.vector_store %arg19[%c0_61, %c0_62], %124 {strides = array<i32>} : memref<8x128xf32, #tpu.memory_space<vmem>>, vector<8x128xf32>,
    return
  }
  func.func @transform_0(%arg0: i32) -> (i32, i32) {
    %c0_i32 = arith.constant 0 : i32
    %c0_i32_0 = arith.constant 0 : i32
    return %arg0, %c0_i32 : i32, i32
  }
  func.func @transform_1(%arg0: i32) -> (i32, i32) {
    %c0_i32 = arith.constant 0 : i32
    %c0_i32_0 = arith.constant 0 : i32
    return %arg0, %c0_i32 : i32, i32
  }
  func.func @transform_2(%arg0: i32) -> (i32, i32) {
    %c0_i32 = arith.constant 0 : i32
    %c0_i32_0 = arith.constant 0 : i32
    %c0_i32_1 = arith.constant 0 : i32
    return %c0_i32, %c0_i32_0 : i32, i32
  }
  func.func @transform_3(%arg0: i32) -> (i32, i32) {
    %c0_i32 = arith.constant 0 : i32
    %c0_i32_0 = arith.constant 0 : i32
    %c0_i32_1 = arith.constant 0 : i32
    return %c0_i32, %c0_i32_0 : i32, i32
  }
  func.func @transform_4(%arg0: i32) -> (i32, i32) {
    %c0_i32 = arith.constant 0 : i32
    %c0_i32_0 = arith.constant 0 : i32
    %c0_i32_1 = arith.constant 0 : i32
    return %c0_i32, %c0_i32_0 : i32, i32
  }
  func.func @transform_5(%arg0: i32) -> (i32, i32) {
    %c0_i32 = arith.constant 0 : i32
    %c0_i32_0 = arith.constant 0 : i32
    %c0_i32_1 = arith.constant 0 : i32
    return %c0_i32, %c0_i32_0 : i32, i32
  }
  func.func @transform_6(%arg0: i32) -> (i32, i32) {
    %c0_i32 = arith.constant 0 : i32
    %c0_i32_0 = arith.constant 0 : i32
    %c0_i32_1 = arith.constant 0 : i32
    return %c0_i32, %c0_i32_0 : i32, i32
  }
  func.func @transform_7(%arg0: i32) -> (i32, i32) {
    %c0_i32 = arith.constant 0 : i32
    %c0_i32_0 = arith.constant 0 : i32
    %c0_i32_1 = arith.constant 0 : i32
    return %c0_i32, %c0_i32_0 : i32, i32
  }
  func.func @transform_8(%arg0: i32) -> (i32, i32) {
    %c0_i32 = arith.constant 0 : i32
    %c0_i32_0 = arith.constant 0 : i32
    %c0_i32_1 = arith.constant 0 : i32
    return %c0_i32, %c0_i32_0 : i32, i32
  }
  func.func @transform_9(%arg0: i32) -> (i32, i32) {
    %c0_i32 = arith.constant 0 : i32
    %c0_i32_0 = arith.constant 0 : i32
    %c0_i32_1 = arith.constant 0 : i32
    return %c0_i32, %c0_i32_0 : i32, i32
  }
  func.func @transform_10(%arg0: i32) -> (i32, i32) {
    %c0_i32 = arith.constant 0 : i32
    %c0_i32_0 = arith.constant 0 : i32
    %c0_i32_1 = arith.constant 0 : i32
    return %c0_i32, %c0_i32_0 : i32, i32
  }
  func.func @transform_11(%arg0: i32) -> (i32, i32) {
    %c0_i32 = arith.constant 0 : i32
    %c0_i32_0 = arith.constant 0 : i32
    %c0_i32_1 = arith.constant 0 : i32
    return %c0_i32, %c0_i32_0 : i32, i32
  }
  func.func @transform_12(%arg0: i32) -> (i32, i32) {
    %c0_i32 = arith.constant 0 : i32
    %c0_i32_0 = arith.constant 0 : i32
    %c0_i32_1 = arith.constant 0 : i32
    return %c0_i32, %c0_i32_0 : i32, i32
  }
  func.func @transform_13(%arg0: i32) -> (i32, i32) {
    %c0_i32 = arith.constant 0 : i32
    %c0_i32_0 = arith.constant 0 : i32
    %c0_i32_1 = arith.constant 0 : i32
    return %c0_i32, %c0_i32_0 : i32, i32
  }
  func.func @transform_14(%arg0: i32) -> (i32, i32) {
    %c0_i32 = arith.constant 0 : i32
    %c0_i32_0 = arith.constant 0 : i32
    %c0_i32_1 = arith.constant 0 : i32
    return %c0_i32, %c0_i32_0 : i32, i32
  }
  func.func @transform_15(%arg0: i32) -> (i32, i32) {
    %c0_i32 = arith.constant 0 : i32
    %c0_i32_0 = arith.constant 0 : i32
    %c0_i32_1 = arith.constant 0 : i32
    return %c0_i32, %c0_i32_0 : i32, i32
  }
  func.func @transform_16(%arg0: i32) -> (i32, i32) {
    %c0_i32 = arith.constant 0 : i32
    %c0_i32_0 = arith.constant 0 : i32
    %c0_i32_1 = arith.constant 0 : i32
    return %c0_i32, %c0_i32_0 : i32, i32
  }
  func.func @transform_17(%arg0: i32) -> (i32, i32) {
    %c0_i32 = arith.constant 0 : i32
    %c0_i32_0 = arith.constant 0 : i32
    %c0_i32_1 = arith.constant 0 : i32
    return %c0_i32, %c0_i32_0 : i32, i32
  }
  func.func @transform_18(%arg0: i32) -> (i32, i32) {
    %c0_i32 = arith.constant 0 : i32
    %c0_i32_0 = arith.constant 0 : i32
    return %arg0, %c0_i32 : i32, i32
  }
}

</mosaic_0001>

<llo_original>
// kernel: tpu_custom_call.1
$region0: #{tpu_custom_call.1}
  #allocation0 [shape = 'u32[]', space=smem, size = 0x4, offset = 0x4, fixed_abs, tag = 'smem constant byte address 0x4 - core index']
  #allocation1 [shape = 'u32[144,128]{1,0:T(1,128)}', space=vmem, size = 0x12000, scoped, tag = 'internal scratch']
  %s0 = inlined_call_operand.hbm [shape: f32[8,32], index: 0, kind: input, shape index: {}]
  %s1 = inlined_call_operand.hbm [shape: f32[8,8], index: 1, kind: input, shape index: {}]
  %s2 = inlined_call_operand.hbm [shape: f32[32,32], index: 2, kind: input, shape index: {}]
  %s3 = inlined_call_operand.vmem [shape: f32[1,32], index: 3, kind: input, shape index: {}]
  %s4 = inlined_call_operand.hbm [shape: f32[1,32], index: 4, kind: input, shape index: {}]
  %s5 = inlined_call_operand.hbm [shape: f32[1,32], index: 5, kind: input, shape index: {}]
  %s6 = inlined_call_operand.hbm [shape: f32[32,32], index: 6, kind: input, shape index: {}]
  %s7 = inlined_call_operand.vmem [shape: f32[8,32], index: 7, kind: input, shape index: {}]
  %s8 = inlined_call_operand.hbm [shape: f32[1,32], index: 8, kind: input, shape index: {}]
  %s9 = inlined_call_operand.hbm [shape: f32[1,32], index: 9, kind: input, shape index: {}]
  %s10 = inlined_call_operand.hbm [shape: f32[1,32], index: 10, kind: input, shape index: {}]
  %s11 = inlined_call_operand.vmem [shape: f32[32,32], index: 11, kind: input, shape index: {}]
  %s12 = inlined_call_operand.vmem [shape: f32[1,32], index: 12, kind: input, shape index: {}]
  %s13 = inlined_call_operand.vmem [shape: f32[1,32], index: 13, kind: input, shape index: {}]
  %s14 = inlined_call_operand.vmem [shape: f32[1,32], index: 14, kind: input, shape index: {}]
  %s15 = inlined_call_operand.hbm [shape: f32[32,128], index: 15, kind: input, shape index: {}]
  %s16 = inlined_call_operand.vmem [shape: f32[1,128], index: 16, kind: input, shape index: {}]
  %s17 = inlined_call_operand.vmem [shape: f32[1,128], index: 17, kind: input, shape index: {}]
  %s18 = inlined_call_operand.hbm [shape: f32[8,128], index: 18, kind: output, shape index: {}]
  %s19 = sld [smem:[#allocation0]]
  $region122: #{tpu_custom_call.1} parent=0
    _
  %s21 = ssub.s32 1, %s19
  %s22 = scalar_select 0, %s21, %s19
  $region1: #{tpu_custom_call.1} parent=0
    #allocation2 [shape = 'u8[4096]{0}', space=vmem, size = 0x1000, scoped, tag = 'input window, operand 0, single buffered']
    #allocation3 [shape = 's32[1]{0}', space=sflag, size = 0x4, scoped, tag = 'scoped memory for tpu_custom_call.1']
    #allocation4 [shape = 's32[1]{0}', space=sflag, size = 0x4, scoped, tag = 'scoped memory for tpu_custom_call.1']
    #allocation5 [shape = 'u8[4096]{0}', space=vmem, size = 0x1000, scoped, tag = 'input window, operand 1, single buffered']
    #allocation6 [shape = 's32[1]{0}', space=sflag, size = 0x4, scoped, tag = 'scoped memory for tpu_custom_call.1']
    #allocation7 [shape = 'u8[16384]{0}', space=vmem, size = 0x4000, scoped, tag = 'input window, operand 2, single buffered']
    #allocation8 [shape = 'u8[512]{0}', space=vmem, size = 0x400, scoped, tag = 'input window, operand 4, single buffered']
    #allocation9 [shape = 's32[1]{0}', space=sflag, size = 0x4, scoped, tag = 'scoped memory for tpu_custom_call.1']
    #allocation10 [shape = 'u8[512]{0}', space=vmem, size = 0x400, scoped, tag = 'input window, operand 5, single buffered']
    #allocation11 [shape = 'u8[16384]{0}', space=vmem, size = 0x4000, scoped, tag = 'input window, operand 6, single buffered']
    #allocation12 [shape = 's32[1]{0}', space=sflag, size = 0x4, scoped, tag = 'scoped memory for tpu_custom_call.1']
    #allocation13 [shape = 'u8[512]{0}', space=vmem, size = 0x400, scoped, tag = 'input window, operand 8, single buffered']
    #allocation14 [shape = 'u8[512]{0}', space=vmem, size = 0x400, scoped, tag = 'input window, operand 9, single buffered']
    #allocation15 [shape = 's32[1]{0}', space=sflag, size = 0x4, scoped, tag = 'scoped memory for tpu_custom_call.1']
    #allocation16 [shape = 'u8[512]{0}', space=vmem, size = 0x400, scoped, tag = 'input window, operand 10, single buffered']
    #allocation17 [shape = 'u8[16384]{0}', space=vmem, size = 0x4000, scoped, tag = 'input window, operand 15, single buffered']
    #allocation18 [shape = 's32[1]{0}', space=sflag, size = 0x4, scoped, tag = 'scoped memory for tpu_custom_call.1']
    #allocation19 [shape = 'u8[4096]{0}', space=vmem, size = 0x1000, scoped, tag = 'output window, operand 0, single buffered']
    %23 = vsyncpa [#allocation3], 0
    %24 = vsyncpa [#allocation6], 0
    %25 = vsyncpa [#allocation9], 0
    %26 = vsyncpa [#allocation12], 0
    %27 = vsyncpa [#allocation15], 0
    %28 = vsyncpa [#allocation18], 0
    %29 = vsyncpa [#allocation4], 0
    // Predicated region
    $region2: #{tpu_custom_call.1} parent=1 // pred_check
      _
    $region3: #{tpu_custom_call.1} parent=1 // pred_check_branch
      %31 = sbr.rel (0) target = $region5
    $region4: #{tpu_custom_call.1} parent=1 // pred_region
      %s33 = ssub.s32 128, 128
      %34 = vsyncadd [#allocation3], %s33
      %s36 = sshll.u32 [#allocation2], 4
      %s37 = int_to_ptr.vmem [resolvable:$true] %s36
      %39 = dma.hbm_to_vmem [thread:$0]  %s0, 128, %s37, [#allocation3]
    $region5: #{tpu_custom_call.1} parent=1 // pred_fallthru
      _
    // Predicated region
    $region6: #{tpu_custom_call.1} parent=1 // pred_check
      _
    $region7: #{tpu_custom_call.1} parent=1 // pred_check_branch
      %41 = sbr.rel (0) target = $region9
    $region8: #{tpu_custom_call.1} parent=1 // pred_region
      %s43 = ssub.s32 128, 128
      %44 = vsyncadd [#allocation6], %s43
      %s46 = sshll.u32 [#allocation5], 4
      %s47 = int_to_ptr.vmem [resolvable:$true] %s46
      %49 = dma.hbm_to_vmem [thread:$0]  %s1, 128, %s47, [#allocation6]
    $region9: #{tpu_custom_call.1} parent=1 // pred_fallthru
      _
    // Predicated region
    $region10: #{tpu_custom_call.1} parent=1 // pred_check
      _
    $region11: #{tpu_custom_call.1} parent=1 // pred_check_branch
      %51 = sbr.rel (0) target = $region13
    $region12: #{tpu_custom_call.1} parent=1 // pred_region
      %s53 = ssub.s32 512, 512
      %54 = vsyncadd [#allocation6], %s53
      %s55 = sshll.u32 [#allocation7], 4
      %s56 = int_to_ptr.vmem [resolvable:$true] %s55
      %61 = dma.hbm_to_vmem [thread:$0]  %s2, 512, %s56, [#allocation6], 128, 128, 8
    $region13: #{tpu_custom_call.1} parent=1 // pred_fallthru
      _
    // Predicated region
    $region14: #{tpu_custom_call.1} parent=1 // pred_check
      _
    $region15: #{tpu_custom_call.1} parent=1 // pred_check_branch
      %63 = sbr.rel (0) target = $region17
    $region16: #{tpu_custom_call.1} parent=1 // pred_region
      _
    $region17: #{tpu_custom_call.1} parent=1 // pred_fallthru
      _
    // Predicated region
    $region18: #{tpu_custom_call.1} parent=1 // pred_check
      _
    $region19: #{tpu_custom_call.1} parent=1 // pred_check_branch
      %65 = sbr.rel (0) target = $region21
    $region20: #{tpu_custom_call.1} parent=1 // pred_region
      %s67 = ssub.s32 16, 16
      %68 = vsyncadd [#allocation9], %s67
      %s70 = sshll.u32 [#allocation8], 4
      %s71 = int_to_ptr.vmem [resolvable:$true] %s70
      %73 = dma.hbm_to_vmem [thread:$0]  %s4, 16, %s71, [#allocation9]
    $region21: #{tpu_custom_call.1} parent=1 // pred_fallthru
      _
    // Predicated region
    $region22: #{tpu_custom_call.1} parent=1 // pred_check
      _
    $region23: #{tpu_custom_call.1} parent=1 // pred_check_branch
      %75 = sbr.rel (0) target = $region25
    $region24: #{tpu_custom_call.1} parent=1 // pred_region
      %s77 = ssub.s32 16, 16
      %78 = vsyncadd [#allocation9], %s77
      %s80 = sshll.u32 [#allocation10], 4
      %s81 = int_to_ptr.vmem [resolvable:$true] %s80
      %83 = dma.hbm_to_vmem [thread:$0]  %s5, 16, %s81, [#allocation9]
    $region25: #{tpu_custom_call.1} parent=1 // pred_fallthru
      _
    // Predicated region
    $region26: #{tpu_custom_call.1} parent=1 // pred_check
      _
    $region27: #{tpu_custom_call.1} parent=1 // pred_check_branch
      %85 = sbr.rel (0) target = $region29
    $region28: #{tpu_custom_call.1} parent=1 // pred_region
      %s87 = ssub.s32 512, 512
      %88 = vsyncadd [#allocation12], %s87
      %s89 = sshll.u32 [#allocation11], 4
      %s90 = int_to_ptr.vmem [resolvable:$true] %s89
      %95 = dma.hbm_to_vmem [thread:$0]  %s6, 512, %s90, [#allocation12], 128, 128, 8
    $region29: #{tpu_custom_call.1} parent=1 // pred_fallthru
      _
    // Predicated region
    $region30: #{tpu_custom_call.1} parent=1 // pred_check
      _
    $region31: #{tpu_custom_call.1} parent=1 // pred_check_branch
      %97 = sbr.rel (0) target = $region33
    $region32: #{tpu_custom_call.1} parent=1 // pred_region
      _
    $region33: #{tpu_custom_call.1} parent=1 // pred_fallthru
      _
    // Predicated region
    $region34: #{tpu_custom_call.1} parent=1 // pred_check
      _
    $region35: #{tpu_custom_call.1} parent=1 // pred_check_branch
      %99 = sbr.rel (0) target = $region37
    $region36: #{tpu_custom_call.1} parent=1 // pred_region
      %s101 = ssub.s32 16, 16
      %102 = vsyncadd [#allocation12], %s101
      %s104 = sshll.u32 [#allocation13], 4
      %s105 = int_to_ptr.vmem [resolvable:$true] %s104
      %107 = dma.hbm_to_vmem [thread:$0]  %s8, 16, %s105, [#allocation12]
    $region37: #{tpu_custom_call.1} parent=1 // pred_fallthru
      _
    // Predicated region
    $region38: #{tpu_custom_call.1} parent=1 // pred_check
      _
    $region39: #{tpu_custom_call.1} parent=1 // pred_check_branch
      %109 = sbr.rel (0) target = $region41
    $region40: #{tpu_custom_call.1} parent=1 // pred_region
      %s111 = ssub.s32 16, 16
      %112 = vsyncadd [#allocation15], %s111
      %s114 = sshll.u32 [#allocation14], 4
      %s115 = int_to_ptr.vmem [resolvable:$true] %s114
      %117 = dma.hbm_to_vmem [thread:$0]  %s9, 16, %s115, [#allocation15]
    $region41: #{tpu_custom_call.1} parent=1 // pred_fallthru
      _
    // Predicated region
    $region42: #{tpu_custom_call.1} parent=1 // pred_check
      _
    $region43: #{tpu_custom_call.1} parent=1 // pred_check_branch
      %119 = sbr.rel (0) target = $region45
    $region44: #{tpu_custom_call.1} parent=1 // pred_region
      %s121 = ssub.s32 16, 16
      %122 = vsyncadd [#allocation15], %s121
      %s124 = sshll.u32 [#allocation16], 4
      %s125 = int_to_ptr.vmem [resolvable:$true] %s124
      %127 = dma.hbm_to_vmem [thread:$0]  %s10, 16, %s125, [#allocation15]
    $region45: #{tpu_custom_call.1} parent=1 // pred_fallthru
      _
    // Predicated region
    $region46: #{tpu_custom_call.1} parent=1 // pred_check
      _
    $region47: #{tpu_custom_call.1} parent=1 // pred_check_branch
      %129 = sbr.rel (0) target = $region49
    $region48: #{tpu_custom_call.1} parent=1 // pred_region
      _
    $region49: #{tpu_custom_call.1} parent=1 // pred_fallthru
      _
    // Predicated region
    $region50: #{tpu_custom_call.1} parent=1 // pred_check
      _
    $region51: #{tpu_custom_call.1} parent=1 // pred_check_branch
      %131 = sbr.rel (0) target = $region53
    $region52: #{tpu_custom_call.1} parent=1 // pred_region
      _
    $region53: #{tpu_custom_call.1} parent=1 // pred_fallthru
      _
    // Predicated region
    $region54: #{tpu_custom_call.1} parent=1 // pred_check
      _
    $region55: #{tpu_custom_call.1} parent=1 // pred_check_branch
      %133 = sbr.rel (0) target = $region57
    $region56: #{tpu_custom_call.1} parent=1 // pred_region
      _
    $region57: #{tpu_custom_call.1} parent=1 // pred_fallthru
      _
    // Predicated region
    $region58: #{tpu_custom_call.1} parent=1 // pred_check
      _
    $region59: #{tpu_custom_call.1} parent=1 // pred_check_branch
      %135 = sbr.rel (0) target = $region61
    $region60: #{tpu_custom_call.1} parent=1 // pred_region
      _
    $region61: #{tpu_custom_call.1} parent=1 // pred_fallthru
      _
    // Predicated region
    $region62: #{tpu_custom_call.1} parent=1 // pred_check
      _
    $region63: #{tpu_custom_call.1} parent=1 // pred_check_branch
      %137 = sbr.rel (0) target = $region65
    $region64: #{tpu_custom_call.1} parent=1 // pred_region
      %s139 = ssub.s32 512, 512
      %140 = vsyncadd [#allocation18], %s139
      %s141 = sshll.u32 [#allocation17], 4
      %s142 = int_to_ptr.vmem [resolvable:$true] %s141
      %147 = dma.hbm_to_vmem [thread:$0]  %s15, 512, %s142, [#allocation18], 128, 128, 8
    $region65: #{tpu_custom_call.1} parent=1 // pred_fallthru
      _
    // Predicated region
    $region66: #{tpu_custom_call.1} parent=1 // pred_check
      _
    $region67: #{tpu_custom_call.1} parent=1 // pred_check_branch
      %149 = sbr.rel (0) target = $region69
    $region68: #{tpu_custom_call.1} parent=1 // pred_region
      _
    $region69: #{tpu_custom_call.1} parent=1 // pred_fallthru
      _
    // Predicated region
    $region70: #{tpu_custom_call.1} parent=1 // pred_check
      _
    $region71: #{tpu_custom_call.1} parent=1 // pred_check_branch
      %151 = sbr.rel (0) target = $region73
    $region72: #{tpu_custom_call.1} parent=1 // pred_region
      _
    $region73: #{tpu_custom_call.1} parent=1 // pred_fallthru
      _
    // Predicated region
    $region74: #{tpu_custom_call.1} parent=1 // pred_check
      _
    $region75: #{tpu_custom_call.1} parent=1 // pred_check_branch
      %153 = sbr.rel (0) target = $region77
    $region76: #{tpu_custom_call.1} parent=1 // pred_region
      %154 = dma.done [#allocation3], 128
    $region77: #{tpu_custom_call.1} parent=1 // pred_fallthru
      _
    // Predicated region
    $region78: #{tpu_custom_call.1} parent=1 // pred_check
      _
    $region79: #{tpu_custom_call.1} parent=1 // pred_check_branch
      %156 = sbr.rel (0) target = $region81
    $region80: #{tpu_custom_call.1} parent=1 // pred_region
      %157 = dma.done [#allocation6], 128
    $region81: #{tpu_custom_call.1} parent=1 // pred_fallthru
      _
    // Predicated region
    $region82: #{tpu_custom_call.1} parent=1 // pred_check
      _
    $region83: #{tpu_custom_call.1} parent=1 // pred_check_branch
      %159 = sbr.rel (0) target = $region85
    $region84: #{tpu_custom_call.1} parent=1 // pred_region
      %160 = dma.done [#allocation6], 512
    $region85: #{tpu_custom_call.1} parent=1 // pred_fallthru
      _
    // Predicated region
    $region86: #{tpu_custom_call.1} parent=1 // pred_check
      _
    $region87: #{tpu_custom_call.1} parent=1 // pred_check_branch
      %162 = sbr.rel (0) target = $region89
    $region88: #{tpu_custom_call.1} parent=1 // pred_region
      %163 = dma.done [#allocation9], 16
    $region89: #{tpu_custom_call.1} parent=1 // pred_fallthru
      _
    // Predicated region
    $region90: #{tpu_custom_call.1} parent=1 // pred_check
      _
    $region91: #{tpu_custom_call.1} parent=1 // pred_check_branch
      %165 = sbr.rel (0) target = $region93
    $region92: #{tpu_custom_call.1} parent=1 // pred_region
      %166 = dma.done [#allocation9], 16
    $region93: #{tpu_custom_call.1} parent=1 // pred_fallthru
      _
    // Predicated region
    $region94: #{tpu_custom_call.1} parent=1 // pred_check
      _
    $region95: #{tpu_custom_call.1} parent=1 // pred_check_branch
      %168 = sbr.rel (0) target = $region97
    $region96: #{tpu_custom_call.1} parent=1 // pred_region
      %169 = dma.done [#allocation12], 512
    $region97: #{tpu_custom_call.1} parent=1 // pred_fallthru
      _
    // Predicated region
    $region98: #{tpu_custom_call.1} parent=1 // pred_check
      _
    $region99: #{tpu_custom_call.1} parent=1 // pred_check_branch
      %171 = sbr.rel (0) target = $region101
    $region100: #{tpu_custom_call.1} parent=1 // pred_region
      %172 = dma.done [#allocation12], 16
    $region101: #{tpu_custom_call.1} parent=1 // pred_fallthru
      _
    // Predicated region
    $region102: #{tpu_custom_call.1} parent=1 // pred_check
      _
    $region103: #{tpu_custom_call.1} parent=1 // pred_check_branch
      %174 = sbr.rel (0) target = $region105
    $region104: #{tpu_custom_call.1} parent=1 // pred_region
      %175 = dma.done [#allocation15], 16
    $region105: #{tpu_custom_call.1} parent=1 // pred_fallthru
      _
    // Predicated region
    $region106: #{tpu_custom_call.1} parent=1 // pred_check
      _
    $region107: #{tpu_custom_call.1} parent=1 // pred_check_branch
      %177 = sbr.rel (0) target = $region109
    $region108: #{tpu_custom_call.1} parent=1 // pred_region
      %178 = dma.done [#allocation15], 16
    $region109: #{tpu_custom_call.1} parent=1 // pred_fallthru
      _
    // Predicated region
    $region110: #{tpu_custom_call.1} parent=1 // pred_check
      _
    $region111: #{tpu_custom_call.1} parent=1 // pred_check_branch
      %180 = sbr.rel (0) target = $region113
    $region112: #{tpu_custom_call.1} parent=1 // pred_region
      %181 = dma.done [#allocation18], 512
    $region113: #{tpu_custom_call.1} parent=1 // pred_fallthru
      _
    %v182 = vld [vmem:[#allocation2] sm:$0xff]
    %v183 = vld [vmem:[#allocation5] sm:$0xff]
    %v184 = vld [vmem:[#allocation7] sm:$0xff]
    %v185 = vld [vmem:[#allocation7 + $0x8] sm:$0xff]
    %v186 = vld [vmem:[#allocation7 + $0x10] sm:$0xff]
    %v187 = vld [vmem:[#allocation7 + $0x18] sm:$0xff]
    %v188 = vld [vmem:[%s3] sm:$0x1]
    %v190 = vlaneseq
    %v191 = vshrl.u32 %v190, 7
    %v192 = vsub.s32 0, %v191
    %v193 = vrot.slane %v188, %v192
    %vm195 = vcmask 261120
    %v197 = vsel %vm195, %v182, 0
    %199 = vmatprep.subr.mxu0 0.0
    %200 = vmatpush1.msra.mxu0 %v184
    %201 = vmatprep.subr.mxu0 0.0
    %202 = vmatpush1.msra.mxu0 %v185
    %203 = vmatprep.subr.mxu0 0.0
    %204 = vmatpush1.msra.mxu0 %v186
    %205 = vmatprep.subr.mxu0 0.0
    %206 = vmatpush1.msra.mxu0 %v187
    %207 = vmatprep.subr.mxu0 0.0
    %208 = vmatpush1.msra.mxu0 0.0
    %209 = vmatprep.subr.mxu0 0.0
    %210 = vmatpush1.msra.mxu0 0.0
    %211 = vmatprep.subr.mxu0 0.0
    %212 = vmatpush1.msra.mxu0 0.0
    %213 = vmatprep.subr.mxu0 0.0
    %214 = vmatpush1.msra.mxu0 0.0
    %215 = vmatprep.subr.mxu0 0.0
    %216 = vmatpush1.msra.mxu0 0.0
    %217 = vmatprep.subr.mxu0 0.0
    %218 = vmatpush1.msra.mxu0 0.0
    %219 = vmatprep.subr.mxu0 0.0
    %220 = vmatpush1.msra.mxu0 0.0
    %221 = vmatprep.subr.mxu0 0.0
    %222 = vmatpush1.msra.mxu0 0.0
    %223 = vmatprep.subr.mxu0 0.0
    %224 = vmatpush1.msra.mxu0 0.0
    %225 = vmatprep.subr.mxu0 0.0
    %226 = vmatpush1.msra.mxu0 0.0
    %227 = vmatprep.subr.mxu0 0.0
    %228 = vmatpush1.msra.mxu0 0.0
    %229 = vmatprep.subr.mxu0 0.0
    %230 = vmatpush1.msra.mxu0 0.0
    %231 = vmatprep.subr.mxu0 0.0
    %232 = vmatpush1.msra.mxu0 0.0
    %233 = vmatprep.subr.mxu0 0.0
    %234 = vmatpush1.msra.mxu0 0.0
    %235 = vmatprep.subr.mxu0 0.0
    %236 = vmatpush1.msra.mxu0 0.0
    %237 = vmatprep.subr.mxu0 0.0
    %238 = vmatpush1.msra.mxu0 0.0
    %239 = vmatprep.subr.mxu0 0.0
    %240 = vmatpush1.msra.mxu0 0.0
    %241 = vmatprep.subr.mxu0 0.0
    %242 = vmatpush1.msra.mxu0 0.0
    %243 = vmatprep.subr.mxu0 0.0
    %244 = vmatpush1.msra.mxu0 0.0
    %245 = vmatprep.subr.mxu0 0.0
    %246 = vmatpush1.msra.mxu0 0.0
    %247 = vmatprep.subr.mxu0 0.0
    %248 = vmatpush1.msra.mxu0 0.0
    %249 = vmatprep.subr.mxu0 0.0
    %250 = vmatpush1.msra.mxu0 0.0
    %251 = vmatprep.subr.mxu0 0.0
    %252 = vmatpush1.msra.mxu0 0.0
    %253 = vmatprep.subr.mxu0 0.0
    %254 = vmatpush1.msra.mxu0 0.0
    %255 = vmatprep.subr.mxu0 0.0
    %256 = vmatpush1.msra.mxu0 0.0
    %257 = vmatprep.subr.mxu0 0.0
    %258 = vmatpush1.msra.mxu0 0.0
    %259 = vmatprep.subr.mxu0 0.0
    %260 = vmatpush1.msra.mxu0 0.0
    %261 = vmatprep.subr.mxu0 0.0
    %262 = vmatpush1.msra.mxu0 0.0
    %263 = vmatprep.mubr.f32.mxu0 0.0
    %264 = vmatmul.mubr.f32.gmra.mrb[0].mxu0 %v197
    %v265 = vpop.f32.mrb[0].mxu0
    %v266 = vadd.f32 %v193, %v265
    %v267 = vpop.f32.mrb[0].mxu0
    %268 = vdwg.mxu0
    %v269 = vld [vmem:[#allocation8] sm:$0x1]
    %v270 = vld [vmem:[#allocation10] sm:$0x1]
    %v271 = vsel %vm195, %v266, 0.0
    %272 = vadd.xlane.f32.xlu0 %v271
    %v273 = vpop.xlane.xlu0 %272
    %v274 = vrcp.pop 32.0
    %v275 = vmul.f32 %v273, %v274
    %v276 = vsub.f32 %v266, %v275
    %v277 = vmul.f32 %v276, %v276
    %v278 = vsel %vm195, %v277, 0.0
    %279 = vadd.xlane.f32.xlu0 %v278
    %v280 = vpop.xlane.xlu0 %279
    %v281 = vmul.f32 %v280, %v274
    %v282 = vadd.f32 %v281, 1e-05
    %v283 = vrsqrt.pop %v282
    %v284 = vmul.f32 %v276, %v283
    %v286 = vlaneseq
    %v287 = vshrl.u32 %v286, 7
    %v288 = vsub.s32 0, %v287
    %v289 = vrot.slane %v269, %v288
    %v291 = vmul.f32 %v284, %v289
    %v293 = vlaneseq
    %v294 = vshrl.u32 %v293, 7
    %v295 = vsub.s32 0, %v294
    %v296 = vrot.slane %v270, %v295
    %v298 = vadd.f32 %v291, %v296
    %v299 = vld [vmem:[#allocation11] sm:$0xff]
    %v300 = vld [vmem:[#allocation11 + $0x8] sm:$0xff]
    %v301 = vld [vmem:[#allocation11 + $0x10] sm:$0xff]
    %v302 = vld [vmem:[#allocation11 + $0x18] sm:$0xff]
    %v303 = vld [vmem:[%s7] sm:$0xff]
    %vm304 = vcmask 64512
    %v306 = vsel %vm304, %v183, 0
    %308 = vmatprep.subr.mxu0 0.0
    %309 = vmatpush1.msra.mxu0 %v303
    %310 = vmatprep.subr.mxu0 0.0
    %311 = vmatpush1.msra.mxu0 0.0
    %312 = vmatprep.subr.mxu0 0.0
    %313 = vmatpush1.msra.mxu0 0.0
    %314 = vmatprep.subr.mxu0 0.0
    %315 = vmatpush1.msra.mxu0 0.0
    %316 = vmatprep.subr.mxu0 0.0
    %317 = vmatpush1.msra.mxu0 0.0
    %318 = vmatprep.subr.mxu0 0.0
    %319 = vmatpush1.msra.mxu0 0.0
    %320 = vmatprep.subr.mxu0 0.0
    %321 = vmatpush1.msra.mxu0 0.0
    %322 = vmatprep.subr.mxu0 0.0
    %323 = vmatpush1.msra.mxu0 0.0
    %324 = vmatprep.subr.mxu0 0.0
    %325 = vmatpush1.msra.mxu0 0.0
    %326 = vmatprep.subr.mxu0 0.0
    %327 = vmatpush1.msra.mxu0 0.0
    %328 = vmatprep.subr.mxu0 0.0
    %329 = vmatpush1.msra.mxu0 0.0
    %330 = vmatprep.subr.mxu0 0.0
    %331 = vmatpush1.msra.mxu0 0.0
    %332 = vmatprep.subr.mxu0 0.0
    %333 = vmatpush1.msra.mxu0 0.0
    %334 = vmatprep.subr.mxu0 0.0
    %335 = vmatpush1.msra.mxu0 0.0
    %336 = vmatprep.subr.mxu0 0.0
    %337 = vmatpush1.msra.mxu0 0.0
    %338 = vmatprep.subr.mxu0 0.0
    %339 = vmatpush1.msra.mxu0 0.0
    %340 = vmatprep.subr.mxu0 0.0
    %341 = vmatpush1.msra.mxu0 0.0
    %342 = vmatprep.subr.mxu0 0.0
    %343 = vmatpush1.msra.mxu0 0.0
    %344 = vmatprep.subr.mxu0 0.0
    %345 = vmatpush1.msra.mxu0 0.0
    %346 = vmatprep.subr.mxu0 0.0
    %347 = vmatpush1.msra.mxu0 0.0
    %348 = vmatprep.subr.mxu0 0.0
    %349 = vmatpush1.msra.mxu0 0.0
    %350 = vmatprep.subr.mxu0 0.0
    %351 = vmatpush1.msra.mxu0 0.0
    %352 = vmatprep.subr.mxu0 0.0
    %353 = vmatpush1.msra.mxu0 0.0
    %354 = vmatprep.subr.mxu0 0.0
    %355 = vmatpush1.msra.mxu0 0.0
    %356 = vmatprep.subr.mxu0 0.0
    %357 = vmatpush1.msra.mxu0 0.0
    %358 = vmatprep.subr.mxu0 0.0
    %359 = vmatpush1.msra.mxu0 0.0
    %360 = vmatprep.subr.mxu0 0.0
    %361 = vmatpush1.msra.mxu0 0.0
    %362 = vmatprep.subr.mxu0 0.0
    %363 = vmatpush1.msra.mxu0 0.0
    %364 = vmatprep.subr.mxu0 0.0
    %365 = vmatpush1.msra.mxu0 0.0
    %366 = vmatprep.subr.mxu0 0.0
    %367 = vmatpush1.msra.mxu0 0.0
    %368 = vmatprep.subr.mxu0 0.0
    %369 = vmatpush1.msra.mxu0 0.0
    %370 = vmatprep.subr.mxu0 0.0
    %371 = vmatpush1.msra.mxu0 0.0
    %372 = vmatprep.mubr.f32.mxu0 0.0
    %373 = vmatmul.mubr.f32.gmra.mrb[0].mxu0 %v306
    %v374 = vpop.f32.mrb[0].mxu0
    %v375 = vadd.f32 0.0, %v374
    %v376 = vpop.f32.mrb[0].mxu0
    %377 = vdwg.mxu0
    %v379 = vsel %vm195, %v298, 0
    %381 = vmatprep.subr.mxu0 0.0
    %382 = vmatpush1.msra.mxu0 %v299
    %383 = vmatprep.subr.mxu0 0.0
    %384 = vmatpush1.msra.mxu0 %v300
    %385 = vmatprep.subr.mxu0 0.0
    %386 = vmatpush1.msra.mxu0 %v301
    %387 = vmatprep.subr.mxu0 0.0
    %388 = vmatpush1.msra.mxu0 %v302
    %389 = vmatprep.subr.mxu0 0.0
    %390 = vmatpush1.msra.mxu0 0.0
    %391 = vmatprep.subr.mxu0 0.0
    %392 = vmatpush1.msra.mxu0 0.0
    %393 = vmatprep.subr.mxu0 0.0
    %394 = vmatpush1.msra.mxu0 0.0
    %395 = vmatprep.subr.mxu0 0.0
    %396 = vmatpush1.msra.mxu0 0.0
    %397 = vmatprep.subr.mxu0 0.0
    %398 = vmatpush1.msra.mxu0 0.0
    %399 = vmatprep.subr.mxu0 0.0
    %400 = vmatpush1.msra.mxu0 0.0
    %401 = vmatprep.subr.mxu0 0.0
    %402 = vmatpush1.msra.mxu0 0.0
    %403 = vmatprep.subr.mxu0 0.0
    %404 = vmatpush1.msra.mxu0 0.0
    %405 = vmatprep.subr.mxu0 0.0
    %406 = vmatpush1.msra.mxu0 0.0
    %407 = vmatprep.subr.mxu0 0.0
    %408 = vmatpush1.msra.mxu0 0.0
    %409 = vmatprep.subr.mxu0 0.0
    %410 = vmatpush1.msra.mxu0 0.0
    %411 = vmatprep.subr.mxu0 0.0
    %412 = vmatpush1.msra.mxu0 0.0
    %413 = vmatprep.subr.mxu0 0.0
    %414 = vmatpush1.msra.mxu0 0.0
    %415 = vmatprep.subr.mxu0 0.0
    %416 = vmatpush1.msra.mxu0 0.0
    %417 = vmatprep.subr.mxu0 0.0
    %418 = vmatpush1.msra.mxu0 0.0
    %419 = vmatprep.subr.mxu0 0.0
    %420 = vmatpush1.msra.mxu0 0.0
    %421 = vmatprep.subr.mxu0 0.0
    %422 = vmatpush1.msra.mxu0 0.0
    %423 = vmatprep.subr.mxu0 0.0
    %424 = vmatpush1.msra.mxu0 0.0
    %425 = vmatprep.subr.mxu0 0.0
    %426 = vmatpush1.msra.mxu0 0.0
    %427 = vmatprep.subr.mxu0 0.0
    %428 = vmatpush1.msra.mxu0 0.0
    %429 = vmatprep.subr.mxu0 0.0
    %430 = vmatpush1.msra.mxu0 0.0
    %431 = vmatprep.subr.mxu0 0.0
    %432 = vmatpush1.msra.mxu0 0.0
    %433 = vmatprep.subr.mxu0 0.0
    %434 = vmatpush1.msra.mxu0 0.0
    %435 = vmatprep.subr.mxu0 0.0
    %436 = vmatpush1.msra.mxu0 0.0
    %437 = vmatprep.subr.mxu0 0.0
    %438 = vmatpush1.msra.mxu0 0.0
    %439 = vmatprep.subr.mxu0 0.0
    %440 = vmatpush1.msra.mxu0 0.0
    %441 = vmatprep.subr.mxu0 0.0
    %442 = vmatpush1.msra.mxu0 0.0
    %443 = vmatprep.subr.mxu0 0.0
    %444 = vmatpush1.msra.mxu0 0.0
    %445 = vmatprep.mubr.f32.mxu0 0.0
    %446 = vmatmul.mubr.f32.gmra.mrb[0].mxu0 %v379
    %v447 = vpop.f32.mrb[0].mxu0
    %v448 = vadd.f32 %v375, %v447
    %v449 = vpop.f32.mrb[0].mxu0
    %450 = vdwg.mxu0
    %v451 = vld [vmem:[#allocation13] sm:$0x1]
    %v453 = vlaneseq
    %v454 = vshrl.u32 %v453, 7
    %v455 = vsub.s32 0, %v454
    %v456 = vrot.slane %v451, %v455
    %v458 = vadd.f32 %v448, %v456
    %v459 = vld [vmem:[#allocation14] sm:$0x1]
    %v460 = vld [vmem:[#allocation16] sm:$0x1]
    %v461 = vsel %vm195, %v458, 0.0
    %462 = vadd.xlane.f32.xlu0 %v461
    %v463 = vpop.xlane.xlu0 %462
    %v464 = vmul.f32 %v463, %v274
    %v465 = vsub.f32 %v458, %v464
    %v466 = vmul.f32 %v465, %v465
    %v467 = vsel %vm195, %v466, 0.0
    %468 = vadd.xlane.f32.xlu0 %v467
    %v469 = vpop.xlane.xlu0 %468
    %v470 = vmul.f32 %v469, %v274
    %v471 = vadd.f32 %v470, 1e-05
    %v472 = vrsqrt.pop %v471
    %v473 = vmul.f32 %v465, %v472
    %v475 = vlaneseq
    %v476 = vshrl.u32 %v475, 7
    %v477 = vsub.s32 0, %v476
    %v478 = vrot.slane %v459, %v477
    %v480 = vmul.f32 %v473, %v478
    %v482 = vlaneseq
    %v483 = vshrl.u32 %v482, 7
    %v484 = vsub.s32 0, %v483
    %v485 = vrot.slane %v460, %v484
    %v487 = vadd.f32 %v480, %v485
    %v488 = vmax.f32 %v487, 0.0
    %v489 = vld [vmem:[%s11] sm:$0xff]
    %v490 = vld [vmem:[%s11 + $0x8] sm:$0xff]
    %v491 = vld [vmem:[%s11 + $0x10] sm:$0xff]
    %v492 = vld [vmem:[%s11 + $0x18] sm:$0xff]
    %v493 = vld [vmem:[%s12] sm:$0x1]
    %v495 = vlaneseq
    %v496 = vshrl.u32 %v495, 7
    %v497 = vsub.s32 0, %v496
    %v498 = vrot.slane %v493, %v497
    %v501 = vsel %vm195, %v488, 0
    %503 = vmatprep.subr.mxu0 0.0
    %504 = vmatpush1.msra.mxu0 %v489
    %505 = vmatprep.subr.mxu0 0.0
    %506 = vmatpush1.msra.mxu0 %v490
    %507 = vmatprep.subr.mxu0 0.0
    %508 = vmatpush1.msra.mxu0 %v491
    %509 = vmatprep.subr.mxu0 0.0
    %510 = vmatpush1.msra.mxu0 %v492
    %511 = vmatprep.subr.mxu0 0.0
    %512 = vmatpush1.msra.mxu0 0.0
    %513 = vmatprep.subr.mxu0 0.0
    %514 = vmatpush1.msra.mxu0 0.0
    %515 = vmatprep.subr.mxu0 0.0
    %516 = vmatpush1.msra.mxu0 0.0
    %517 = vmatprep.subr.mxu0 0.0
    %518 = vmatpush1.msra.mxu0 0.0
    %519 = vmatprep.subr.mxu0 0.0
    %520 = vmatpush1.msra.mxu0 0.0
    %521 = vmatprep.subr.mxu0 0.0
    %522 = vmatpush1.msra.mxu0 0.0
    %523 = vmatprep.subr.mxu0 0.0
    %524 = vmatpush1.msra.mxu0 0.0
    %525 = vmatprep.subr.mxu0 0.0
    %526 = vmatpush1.msra.mxu0 0.0
    %527 = vmatprep.subr.mxu0 0.0
    %528 = vmatpush1.msra.mxu0 0.0
    %529 = vmatprep.subr.mxu0 0.0
    %530 = vmatpush1.msra.mxu0 0.0
    %531 = vmatprep.subr.mxu0 0.0
    %532 = vmatpush1.msra.mxu0 0.0
    %533 = vmatprep.subr.mxu0 0.0
    %534 = vmatpush1.msra.mxu0 0.0
    %535 = vmatprep.subr.mxu0 0.0
    %536 = vmatpush1.msra.mxu0 0.0
    %537 = vmatprep.subr.mxu0 0.0
    %538 = vmatpush1.msra.mxu0 0.0
    %539 = vmatprep.subr.mxu0 0.0
    %540 = vmatpush1.msra.mxu0 0.0
    %541 = vmatprep.subr.mxu0 0.0
    %542 = vmatpush1.msra.mxu0 0.0
    %543 = vmatprep.subr.mxu0 0.0
    %544 = vmatpush1.msra.mxu0 0.0
    %545 = vmatprep.subr.mxu0 0.0
    %546 = vmatpush1.msra.mxu0 0.0
    %547 = vmatprep.subr.mxu0 0.0
    %548 = vmatpush1.msra.mxu0 0.0
    %549 = vmatprep.subr.mxu0 0.0
    %550 = vmatpush1.msra.mxu0 0.0
    %551 = vmatprep.subr.mxu0 0.0
    %552 = vmatpush1.msra.mxu0 0.0
    %553 = vmatprep.subr.mxu0 0.0
    %554 = vmatpush1.msra.mxu0 0.0
    %555 = vmatprep.subr.mxu0 0.0
    %556 = vmatpush1.msra.mxu0 0.0
    %557 = vmatprep.subr.mxu0 0.0
    %558 = vmatpush1.msra.mxu0 0.0
    %559 = vmatprep.subr.mxu0 0.0
    %560 = vmatpush1.msra.mxu0 0.0
    %561 = vmatprep.subr.mxu0 0.0
    %562 = vmatpush1.msra.mxu0 0.0
    %563 = vmatprep.subr.mxu0 0.0
    %564 = vmatpush1.msra.mxu0 0.0
    %565 = vmatprep.subr.mxu0 0.0
    %566 = vmatpush1.msra.mxu0 0.0
    %567 = vmatprep.mubr.f32.mxu0 0.0
    %568 = vmatmul.mubr.f32.gmra.mrb[0].mxu0 %v501
    %v569 = vpop.f32.mrb[0].mxu0
    %v570 = vadd.f32 %v498, %v569
    %v571 = vpop.f32.mrb[0].mxu0
    %572 = vdwg.mxu0
    %v573 = vld [vmem:[%s13] sm:$0x1]
    %v574 = vld [vmem:[%s14] sm:$0x1]
    %v575 = vsel %vm195, %v570, 0.0
    %576 = vadd.xlane.f32.xlu0 %v575
    %v577 = vpop.xlane.xlu0 %576
    %v578 = vmul.f32 %v577, %v274
    %v579 = vsub.f32 %v570, %v578
    %v580 = vmul.f32 %v579, %v579
    %v581 = vsel %vm195, %v580, 0.0
    %582 = vadd.xlane.f32.xlu0 %v581
    %v583 = vpop.xlane.xlu0 %582
    %v584 = vmul.f32 %v583, %v274
    %v585 = vadd.f32 %v584, 1e-05
    %v586 = vrsqrt.pop %v585
    %v587 = vmul.f32 %v579, %v586
    %v589 = vlaneseq
    %v590 = vshrl.u32 %v589, 7
    %v591 = vsub.s32 0, %v590
    %v592 = vrot.slane %v573, %v591
    %v594 = vmul.f32 %v587, %v592
    %v596 = vlaneseq
    %v597 = vshrl.u32 %v596, 7
    %v598 = vsub.s32 0, %v597
    %v599 = vrot.slane %v574, %v598
    %v601 = vadd.f32 %v594, %v599
    %v602 = vmax.f32 %v601, 0.0
    %v603 = vld [vmem:[#allocation17] sm:$0xff]
    %v604 = vld [vmem:[#allocation17 + $0x8] sm:$0xff]
    %v605 = vld [vmem:[#allocation17 + $0x10] sm:$0xff]
    %v606 = vld [vmem:[#allocation17 + $0x18] sm:$0xff]
    %v607 = vld [vmem:[%s16] sm:$0x1]
    %v609 = vlaneseq
    %v610 = vshrl.u32 %v609, 7
    %v611 = vsub.s32 0, %v610
    %v612 = vrot.slane %v607, %v611
    %v615 = vsel %vm195, %v602, 0
    %617 = vmatprep.subr.mxu0 0.0
    %618 = vmatpush1.msra.mxu0 %v603
    %619 = vmatprep.subr.mxu0 0.0
    %620 = vmatpush1.msra.mxu0 %v604
    %621 = vmatprep.subr.mxu0 0.0
    %622 = vmatpush1.msra.mxu0 %v605
    %623 = vmatprep.subr.mxu0 0.0
    %624 = vmatpush1.msra.mxu0 %v606
    %625 = vmatprep.subr.mxu0 0.0
    %626 = vmatpush1.msra.mxu0 0.0
    %627 = vmatprep.subr.mxu0 0.0
    %628 = vmatpush1.msra.mxu0 0.0
    %629 = vmatprep.subr.mxu0 0.0
    %630 = vmatpush1.msra.mxu0 0.0
    %631 = vmatprep.subr.mxu0 0.0
    %632 = vmatpush1.msra.mxu0 0.0
    %633 = vmatprep.subr.mxu0 0.0
    %634 = vmatpush1.msra.mxu0 0.0
    %635 = vmatprep.subr.mxu0 0.0
    %636 = vmatpush1.msra.mxu0 0.0
    %637 = vmatprep.subr.mxu0 0.0
    %638 = vmatpush1.msra.mxu0 0.0
    %639 = vmatprep.subr.mxu0 0.0
    %640 = vmatpush1.msra.mxu0 0.0
    %641 = vmatprep.subr.mxu0 0.0
    %642 = vmatpush1.msra.mxu0 0.0
    %643 = vmatprep.subr.mxu0 0.0
    %644 = vmatpush1.msra.mxu0 0.0
    %645 = vmatprep.subr.mxu0 0.0
    %646 = vmatpush1.msra.mxu0 0.0
    %647 = vmatprep.subr.mxu0 0.0
    %648 = vmatpush1.msra.mxu0 0.0
    %649 = vmatprep.subr.mxu0 0.0
    %650 = vmatpush1.msra.mxu0 0.0
    %651 = vmatprep.subr.mxu0 0.0
    %652 = vmatpush1.msra.mxu0 0.0
    %653 = vmatprep.subr.mxu0 0.0
    %654 = vmatpush1.msra.mxu0 0.0
    %655 = vmatprep.subr.mxu0 0.0
    %656 = vmatpush1.msra.mxu0 0.0
    %657 = vmatprep.subr.mxu0 0.0
    %658 = vmatpush1.msra.mxu0 0.0
    %659 = vmatprep.subr.mxu0 0.0
    %660 = vmatpush1.msra.mxu0 0.0
    %661 = vmatprep.subr.mxu0 0.0
    %662 = vmatpush1.msra.mxu0 0.0
    %663 = vmatprep.subr.mxu0 0.0
    %664 = vmatpush1.msra.mxu0 0.0
    %665 = vmatprep.subr.mxu0 0.0
    %666 = vmatpush1.msra.mxu0 0.0
    %667 = vmatprep.subr.mxu0 0.0
    %668 = vmatpush1.msra.mxu0 0.0
    %669 = vmatprep.subr.mxu0 0.0
    %670 = vmatpush1.msra.mxu0 0.0
    %671 = vmatprep.subr.mxu0 0.0
    %672 = vmatpush1.msra.mxu0 0.0
    %673 = vmatprep.subr.mxu0 0.0
    %674 = vmatpush1.msra.mxu0 0.0
    %675 = vmatprep.subr.mxu0 0.0
    %676 = vmatpush1.msra.mxu0 0.0
    %677 = vmatprep.subr.mxu0 0.0
    %678 = vmatpush1.msra.mxu0 0.0
    %679 = vmatprep.subr.mxu0 0.0
    %680 = vmatpush1.msra.mxu0 0.0
    %681 = vmatprep.mubr.f32.mxu0 0.0
    %682 = vmatmul.mubr.f32.gmra.mrb[0].mxu0 %v615
    %v683 = vpop.f32.mrb[0].mxu0
    %v684 = vadd.f32 %v612, %v683
    %v685 = vpop.f32.mrb[0].mxu0
    %686 = vdwg.mxu0
    %v687 = vld [vmem:[%s17] sm:$0x1]
    %vm688 = vcmp.gt.f32.partialorder %v687, 0.0
    %v689 = vmax.f32 %v684, 0.0
    %vm690 = vcmp.ne.f32.partialorder %v684, %v684
    %v691 = vadd.f32 %v684, 0.0
    %v692 = vand.u32 2147483647, %v684
    %v693 = vsub.f32 0.0, %v692
    %v694 = vmul.f32 %v693, 1.442695
    %v695 = vpow.pop %v694
    %v696 = vadd.f32 %v695, 1.0
    %v697 = vlog2.pop %v696
    %v698 = vmul.f32 %v697, 0.6931472
    %v699 = vmul.f32 -0.5, %v695
    %v700 = vadd.f32 %v699, 1.0
    %v701 = vmul.f32 %v700, %v695
    %v702 = vand.u32 2147483647, %v695
    %vm703 = vcmp.lt.f32.partialorder %v702, 0.0004427343
    %v704 = vsel %vm703, %v701, %v698
    %v705 = vadd.f32 %v689, %v704
    %v706 = vsel %vm690, %v691, %v705
    %v707 = vmul.f32 %v706, 0.001442695
    %v708 = vadd.f32 %v707, 0.0001
    %v709 = vsel %vm688, 1, 0
    %v710 = vlaneseq
    %v711 = vshrl.u32 %v710, 7
    %v712 = vsub.s32 0, %v711
    %v713 = vrot.slane %v709, %v712
    %vm714 = vcmp.eq.s32.totalorder %v713, 1
    %v715 = vsel %vm714, %v708, %v684
    %716 = vst [vmem:[#allocation19] sm:$0xff] %v715
    // Predicated region
    $region114: #{tpu_custom_call.1} parent=1 // pred_check
      _
    $region115: #{tpu_custom_call.1} parent=1 // pred_check_branch
      %718 = sbr.rel (0) target = $region117
    $region116: #{tpu_custom_call.1} parent=1 // pred_region
      %s720 = ssub.s32 128, 128
      %721 = vsyncadd [#allocation4], %s720
      %s723 = sshll.u32 [#allocation19], 4
      %s724 = int_to_ptr.vmem [resolvable:$true] %s723
      %726 = dma.vmem_to_hbm [thread:$0]  %s724, 128, %s18, [#allocation4]
    $region117: #{tpu_custom_call.1} parent=1 // pred_fallthru
      _
    // Predicated region
    $region118: #{tpu_custom_call.1} parent=1 // pred_check
      _
    $region119: #{tpu_custom_call.1} parent=1 // pred_check_branch
      %728 = sbr.rel (0) target = $region121
    $region120: #{tpu_custom_call.1} parent=1 // pred_region
      %729 = dma.done [#allocation4], 128
    $region121: #{tpu_custom_call.1} parent=1 // pred_fallthru
      _
    %730 = vsyncpa [#allocation3], 1
    %731 = vsyncpa [#allocation6], 1
    %732 = vsyncpa [#allocation9], 1
    %733 = vsyncpa [#allocation12], 1
    %734 = vsyncpa [#allocation15], 1
    %735 = vsyncpa [#allocation18], 1
    %736 = vsyncpa [#allocation4], 1

// kernel: tpu_custom_call.1
$region0: #{tpu_custom_call.1}
  #allocation0 [shape = 'u32[]', space=smem, size = 0x4, offset = 0x4, fixed_abs, tag = 'smem constant byte address 0x4 - core index']
  #allocation1 [shape = 'u32[144,128]{1,0:T(1,128)}', space=vmem, size = 0x12000, scoped, tag = 'internal scratch']
  %s0 = inlined_call_operand.hbm [shape: f32[8,32], index: 0, kind: input, shape index: {}]
  %s1 = inlined_call_operand.hbm [shape: f32[8,8], index: 1, kind: input, shape index: {}]
  %s2 = inlined_call_operand.hbm [shape: f32[32,32], index: 2, kind: input, shape index: {}]
  %s3 = inlined_call_operand.vmem [shape: f32[1,32], index: 3, kind: input, shape index: {}]
  %s4 = inlined_call_operand.hbm [shape: f32[1,32], index: 4, kind: input, shape index: {}]
  %s5 = inlined_call_operand.hbm [shape: f32[1,32], index: 5, kind: input, shape index: {}]
  %s6 = inlined_call_operand.hbm [shape: f32[32,32], index: 6, kind: input, shape index: {}]
  %s7 = inlined_call_operand.vmem [shape: f32[8,32], index: 7, kind: input, shape index: {}]
  %s8 = inlined_call_operand.hbm [shape: f32[1,32], index: 8, kind: input, shape index: {}]
  %s9 = inlined_call_operand.hbm [shape: f32[1,32], index: 9, kind: input, shape index: {}]
  %s10 = inlined_call_operand.hbm [shape: f32[1,32], index: 10, kind: input, shape index: {}]
  %s11 = inlined_call_operand.vmem [shape: f32[32,32], index: 11, kind: input, shape index: {}]
  %s12 = inlined_call_operand.vmem [shape: f32[1,32], index: 12, kind: input, shape index: {}]
  %s13 = inlined_call_operand.vmem [shape: f32[1,32], index: 13, kind: input, shape index: {}]
  %s14 = inlined_call_operand.vmem [shape: f32[1,32], index: 14, kind: input, shape index: {}]
  %s15 = inlined_call_operand.hbm [shape: f32[32,128], index: 15, kind: input, shape index: {}]
  %s16 = inlined_call_operand.vmem [shape: f32[1,128], index: 16, kind: input, shape index: {}]
  %s17 = inlined_call_operand.vmem [shape: f32[1,128], index: 17, kind: input, shape index: {}]
  %s18 = inlined_call_operand.hbm [shape: f32[8,128], index: 18, kind: output, shape index: {}]
  %s19 = sld [smem:[#allocation0]]
  $region122: #{tpu_custom_call.1} parent=0
    _
  %s21 = ssub.s32 1, %s19
  %s22 = scalar_select 0, %s21, %s19
  $region1: #{tpu_custom_call.1} parent=0
    #allocation2 [shape = 'u8[4096]{0}', space=vmem, size = 0x1000, scoped, tag = 'input window, operand 0, single buffered']
    #allocation3 [shape = 's32[1]{0}', space=sflag, size = 0x4, scoped, tag = 'scoped memory for tpu_custom_call.1']
    #allocation4 [shape = 's32[1]{0}', space=sflag, size = 0x4, scoped, tag = 'scoped memory for tpu_custom_call.1']
    #allocation5 [shape = 'u8[4096]{0}', space=vmem, size = 0x1000, scoped, tag = 'input window, operand 1, single buffered']
    #allocation6 [shape = 's32[1]{0}', space=sflag, size = 0x4, scoped, tag = 'scoped memory for tpu_custom_call.1']
    #allocation7 [shape = 'u8[16384]{0}', space=vmem, size = 0x4000, scoped, tag = 'input window, operand 2, single buffered']
    #allocation8 [shape = 'u8[512]{0}', space=vmem, size = 0x400, scoped, tag = 'input window, operand 4, single buffered']
    #allocation9 [shape = 's32[1]{0}', space=sflag, size = 0x4, scoped, tag = 'scoped memory for tpu_custom_call.1']
    #allocation10 [shape = 'u8[512]{0}', space=vmem, size = 0x400, scoped, tag = 'input window, operand 5, single buffered']
    #allocation11 [shape = 'u8[16384]{0}', space=vmem, size = 0x4000, scoped, tag = 'input window, operand 6, single buffered']
    #allocation12 [shape = 's32[1]{0}', space=sflag, size = 0x4, scoped, tag = 'scoped memory for tpu_custom_call.1']
    #allocation13 [shape = 'u8[512]{0}', space=vmem, size = 0x400, scoped, tag = 'input window, operand 8, single buffered']
    #allocation14 [shape = 'u8[512]{0}', space=vmem, size = 0x400, scoped, tag = 'input window, operand 9, single buffered']
    #allocation15 [shape = 's32[1]{0}', space=sflag, size = 0x4, scoped, tag = 'scoped memory for tpu_custom_call.1']
    #allocation16 [shape = 'u8[512]{0}', space=vmem, size = 0x400, scoped, tag = 'input window, operand 10, single buffered']
    #allocation17 [shape = 'u8[16384]{0}', space=vmem, size = 0x4000, scoped, tag = 'input window, operand 15, single buffered']
    #allocation18 [shape = 's32[1]{0}', space=sflag, size = 0x4, scoped, tag = 'scoped memory for tpu_custom_call.1']
    #allocation19 [shape = 'u8[4096]{0}', space=vmem, size = 0x1000, scoped, tag = 'output window, operand 0, single buffered']
    %23 = vsyncpa [#allocation3], 0
    %24 = vsyncpa [#allocation6], 0
    %25 = vsyncpa [#allocation9], 0
    %26 = vsyncpa [#allocation12], 0
    %27 = vsyncpa [#allocation15], 0
    %28 = vsyncpa [#allocation18], 0
    %29 = vsyncpa [#allocation4], 0
    // Predicated region
    $region2: #{tpu_custom_call.1} parent=1 // pred_check
      _
    $region3: #{tpu_custom_call.1} parent=1 // pred_check_branch
      %31 = sbr.rel (0) target = $region5
    $region4: #{tpu_custom_call.1} parent=1 // pred_region
      %s33 = ssub.s32 128, 128
      %34 = vsyncadd [#allocation3], %s33
      %s36 = sshll.u32 [#allocation2], 4
      %s37 = int_to_ptr.vmem [resolvable:$true] %s36
      %39 = dma.hbm_to_vmem [thread:$0]  %s0, 128, %s37, [#allocation3]
    $region5: #{tpu_custom_call.1} parent=1 // pred_fallthru
      _
    // Predicated region
    $region6: #{tpu_custom_call.1} parent=1 // pred_check
      _
    $region7: #{tpu_custom_call.1} parent=1 // pred_check_branch
      %41 = sbr.rel (0) target = $region9
    $region8: #{tpu_custom_call.1} parent=1 // pred_region
      %s43 = ssub.s32 128, 128
      %44 = vsyncadd [#allocation6], %s43
      %s46 = sshll.u32 [#allocation5], 4
      %s47 = int_to_ptr.vmem [resolvable:$true] %s46
      %49 = dma.hbm_to_vmem [thread:$0]  %s1, 128, %s47, [#allocation6]
    $region9: #{tpu_custom_call.1} parent=1 // pred_fallthru
      _
    // Predicated region
    $region10: #{tpu_custom_call.1} parent=1 // pred_check
      _
    $region11: #{tpu_custom_call.1} parent=1 // pred_check_branch
      %51 = sbr.rel (0) target = $region13
    $region12: #{tpu_custom_call.1} parent=1 // pred_region
      %s53 = ssub.s32 512, 512
      %54 = vsyncadd [#allocation6], %s53
      %s55 = sshll.u32 [#allocation7], 4
      %s56 = int_to_ptr.vmem [resolvable:$true] %s55
      %61 = dma.hbm_to_vmem [thread:$0]  %s2, 512, %s56, [#allocation6], 128, 128, 8
    $region13: #{tpu_custom_call.1} parent=1 // pred_fallthru
      _
    // Predicated region
    $region14: #{tpu_custom_call.1} parent=1 // pred_check
      _
    $region15: #{tpu_custom_call.1} parent=1 // pred_check_branch
      %63 = sbr.rel (0) target = $region17
    $region16: #{tpu_custom_call.1} parent=1 // pred_region
      _
    $region17: #{tpu_custom_call.1} parent=1 // pred_fallthru
      _
    // Predicated region
    $region18: #{tpu_custom_call.1} parent=1 // pred_check
      _
    $region19: #{tpu_custom_call.1} parent=1 // pred_check_branch
      %65 = sbr.rel (0) target = $region21
    $region20: #{tpu_custom_call.1} parent=1 // pred_region
      %s67 = ssub.s32 16, 16
      %68 = vsyncadd [#allocation9], %s67
      %s70 = sshll.u32 [#allocation8], 4
      %s71 = int_to_ptr.vmem [resolvable:$true] %s70
      %73 = dma.hbm_to_vmem [thread:$0]  %s4, 16, %s71, [#allocation9]
    $region21: #{tpu_custom_call.1} parent=1 // pred_fallthru
      _
    // Predicated region
    $region22: #{tpu_custom_call.1} parent=1 // pred_check
      _
    $region23: #{tpu_custom_call.1} parent=1 // pred_check_branch
      %75 = sbr.rel (0) target = $region25
    $region24: #{tpu_custom_call.1} parent=1 // pred_region
      %s77 = ssub.s32 16, 16
      %78 = vsyncadd [#allocation9], %s77
      %s80 = sshll.u32 [#allocation10], 4
      %s81 = int_to_ptr.vmem [resolvable:$true] %s80
      %83 = dma.hbm_to_vmem [thread:$0]  %s5, 16, %s81, [#allocation9]
    $region25: #{tpu_custom_call.1} parent=1 // pred_fallthru
      _
    // Predicated region
    $region26: #{tpu_custom_call.1} parent=1 // pred_check
      _
    $region27: #{tpu_custom_call.1} parent=1 // pred_check_branch
      %85 = sbr.rel (0) target = $region29
    $region28: #{tpu_custom_call.1} parent=1 // pred_region
      %s87 = ssub.s32 512, 512
      %88 = vsyncadd [#allocation12], %s87
      %s89 = sshll.u32 [#allocation11], 4
      %s90 = int_to_ptr.vmem [resolvable:$true] %s89
      %95 = dma.hbm_to_vmem [thread:$0]  %s6, 512, %s90, [#allocation12], 128, 128, 8
    $region29: #{tpu_custom_call.1} parent=1 // pred_fallthru
      _
    // Predicated region
    $region30: #{tpu_custom_call.1} parent=1 // pred_check
      _
    $region31: #{tpu_custom_call.1} parent=1 // pred_check_branch
      %97 = sbr.rel (0) target = $region33
    $region32: #{tpu_custom_call.1} parent=1 // pred_region
      _
    $region33: #{tpu_custom_call.1} parent=1 // pred_fallthru
      _
    // Predicated region
    $region34: #{tpu_custom_call.1} parent=1 // pred_check
      _
    $region35: #{tpu_custom_call.1} parent=1 // pred_check_branch
      %99 = sbr.rel (0) target = $region37
    $region36: #{tpu_custom_call.1} parent=1 // pred_region
      %s101 = ssub.s32 16, 16
      %102 = vsyncadd [#allocation12], %s101
      %s104 = sshll.u32 [#allocation13], 4
      %s105 = int_to_ptr.vmem [resolvable:$true] %s104
      %107 = dma.hbm_to_vmem [thread:$0]  %s8, 16, %s105, [#allocation12]
    $region37: #{tpu_custom_call.1} parent=1 // pred_fallthru
      _
    // Predicated region
    $region38: #{tpu_custom_call.1} parent=1 // pred_check
      _
    $region39: #{tpu_custom_call.1} parent=1 // pred_check_branch
      %109 = sbr.rel (0) target = $region41
    $region40: #{tpu_custom_call.1} parent=1 // pred_region
      %s111 = ssub.s32 16, 16
      %112 = vsyncadd [#allocation15], %s111
      %s114 = sshll.u32 [#allocation14], 4
      %s115 = int_to_ptr.vmem [resolvable:$true] %s114
      %117 = dma.hbm_to_vmem [thread:$0]  %s9, 16, %s115, [#allocation15]
    $region41: #{tpu_custom_call.1} parent=1 // pred_fallthru
      _
    // Predicated region
    $region42: #{tpu_custom_call.1} parent=1 // pred_check
      _
    $region43: #{tpu_custom_call.1} parent=1 // pred_check_branch
      %119 = sbr.rel (0) target = $region45
    $region44: #{tpu_custom_call.1} parent=1 // pred_region
      %s121 = ssub.s32 16, 16
      %122 = vsyncadd [#allocation15], %s121
      %s124 = sshll.u32 [#allocation16], 4
      %s125 = int_to_ptr.vmem [resolvable:$true] %s124
      %127 = dma.hbm_to_vmem [thread:$0]  %s10, 16, %s125, [#allocation15]
    $region45: #{tpu_custom_call.1} parent=1 // pred_fallthru
      _
    // Predicated region
    $region46: #{tpu_custom_call.1} parent=1 // pred_check
      _
    $region47: #{tpu_custom_call.1} parent=1 // pred_check_branch
      %129 = sbr.rel (0) target = $region49
    $region48: #{tpu_custom_call.1} parent=1 // pred_region
      _
    $region49: #{tpu_custom_call.1} parent=1 // pred_fallthru
      _
    // Predicated region
    $region50: #{tpu_custom_call.1} parent=1 // pred_check
      _
    $region51: #{tpu_custom_call.1} parent=1 // pred_check_branch
      %131 = sbr.rel (0) target = $region53
    $region52: #{tpu_custom_call.1} parent=1 // pred_region
      _
    $region53: #{tpu_custom_call.1} parent=1 // pred_fallthru
      _
    // Predicated region
    $region54: #{tpu_custom_call.1} parent=1 // pred_check
      _
    $region55: #{tpu_custom_call.1} parent=1 // pred_check_branch
      %133 = sbr.rel (0) target = $region57
    $region56: #{tpu_custom_call.1} parent=1 // pred_region
      _
    $region57: #{tpu_custom_call.1} parent=1 // pred_fallthru
      _
    // Predicated region
    $region58: #{tpu_custom_call.1} parent=1 // pred_check
      _
    $region59: #{tpu_custom_call.1} parent=1 // pred_check_branch
      %135 = sbr.rel (0) target = $region61
    $region60: #{tpu_custom_call.1} parent=1 // pred_region
      _
    $region61: #{tpu_custom_call.1} parent=1 // pred_fallthru
      _
    // Predicated region
    $region62: #{tpu_custom_call.1} parent=1 // pred_check
      _
    $region63: #{tpu_custom_call.1} parent=1 // pred_check_branch
      %137 = sbr.rel (0) target = $region65
    $region64: #{tpu_custom_call.1} parent=1 // pred_region
      %s139 = ssub.s32 512, 512
      %140 = vsyncadd [#allocation18], %s139
      %s141 = sshll.u32 [#allocation17], 4
      %s142 = int_to_ptr.vmem [resolvable:$true] %s141
      %147 = dma.hbm_to_vmem [thread:$0]  %s15, 512, %s142, [#allocation18], 128, 128, 8
    $region65: #{tpu_custom_call.1} parent=1 // pred_fallthru
      _
    // Predicated region
    $region66: #{tpu_custom_call.1} parent=1 // pred_check
      _
    $region67: #{tpu_custom_call.1} parent=1 // pred_check_branch
      %149 = sbr.rel (0) target = $region69
    $region68: #{tpu_custom_call.1} parent=1 // pred_region
      _
    $region69: #{tpu_custom_call.1} parent=1 // pred_fallthru
      _
    // Predicated region
    $region70: #{tpu_custom_call.1} parent=1 // pred_check
      _
    $region71: #{tpu_custom_call.1} parent=1 // pred_check_branch
      %151 = sbr.rel (0) target = $region73
    $region72: #{tpu_custom_call.1} parent=1 // pred_region
      _
    $region73: #{tpu_custom_call.1} parent=1 // pred_fallthru
      _
    // Predicated region
    $region74: #{tpu_custom_call.1} parent=1 // pred_check
      _
    $region75: #{tpu_custom_call.1} parent=1 // pred_check_branch
      %153 = sbr.rel (0) target = $region77
    $region76: #{tpu_custom_call.1} parent=1 // pred_region
      %154 = dma.done [#allocation3], 128
    $region77: #{tpu_custom_call.1} parent=1 // pred_fallthru
      _
    // Predicated region
    $region78: #{tpu_custom_call.1} parent=1 // pred_check
      _
    $region79: #{tpu_custom_call.1} parent=1 // pred_check_branch
      %156 = sbr.rel (0) target = $region81
    $region80: #{tpu_custom_call.1} parent=1 // pred_region
      %157 = dma.done [#allocation6], 128
    $region81: #{tpu_custom_call.1} parent=1 // pred_fallthru
      _
    // Predicated region
    $region82: #{tpu_custom_call.1} parent=1 // pred_check
      _
    $region83: #{tpu_custom_call.1} parent=1 // pred_check_branch
      %159 = sbr.rel (0) target = $region85
    $region84: #{tpu_custom_call.1} parent=1 // pred_region
      %160 = dma.done [#allocation6], 512
    $region85: #{tpu_custom_call.1} parent=1 // pred_fallthru
      _
    // Predicated region
    $region86: #{tpu_custom_call.1} parent=1 // pred_check
      _
    $region87: #{tpu_custom_call.1} parent=1 // pred_check_branch
      %162 = sbr.rel (0) target = $region89
    $region88: #{tpu_custom_call.1} parent=1 // pred_region
      %163 = dma.done [#allocation9], 16
    $region89: #{tpu_custom_call.1} parent=1 // pred_fallthru
      _
    // Predicated region
    $region90: #{tpu_custom_call.1} parent=1 // pred_check
      _
    $region91: #{tpu_custom_call.1} parent=1 // pred_check_branch
      %165 = sbr.rel (0) target = $region93
    $region92: #{tpu_custom_call.1} parent=1 // pred_region
      %166 = dma.done [#allocation9], 16
    $region93: #{tpu_custom_call.1} parent=1 // pred_fallthru
      _
    // Predicated region
    $region94: #{tpu_custom_call.1} parent=1 // pred_check
      _
    $region95: #{tpu_custom_call.1} parent=1 // pred_check_branch
      %168 = sbr.rel (0) target = $region97
    $region96: #{tpu_custom_call.1} parent=1 // pred_region
      %169 = dma.done [#allocation12], 512
    $region97: #{tpu_custom_call.1} parent=1 // pred_fallthru
      _
    // Predicated region
    $region98: #{tpu_custom_call.1} parent=1 // pred_check
      _
    $region99: #{tpu_custom_call.1} parent=1 // pred_check_branch
      %171 = sbr.rel (0) target = $region101
    $region100: #{tpu_custom_call.1} parent=1 // pred_region
      %172 = dma.done [#allocation12], 16
    $region101: #{tpu_custom_call.1} parent=1 // pred_fallthru
      _
    // Predicated region
    $region102: #{tpu_custom_call.1} parent=1 // pred_check
      _
    $region103: #{tpu_custom_call.1} parent=1 // pred_check_branch
      %174 = sbr.rel (0) target = $region105
    $region104: #{tpu_custom_call.1} parent=1 // pred_region
      %175 = dma.done [#allocation15], 16
    $region105: #{tpu_custom_call.1} parent=1 // pred_fallthru
      _
    // Predicated region
    $region106: #{tpu_custom_call.1} parent=1 // pred_check
      _
    $region107: #{tpu_custom_call.1} parent=1 // pred_check_branch
      %177 = sbr.rel (0) target = $region109
    $region108: #{tpu_custom_call.1} parent=1 // pred_region
      %178 = dma.done [#allocation15], 16
    $region109: #{tpu_custom_call.1} parent=1 // pred_fallthru
      _
    // Predicated region
    $region110: #{tpu_custom_call.1} parent=1 // pred_check
      _
    $region111: #{tpu_custom_call.1} parent=1 // pred_check_branch
      %180 = sbr.rel (0) target = $region113
    $region112: #{tpu_custom_call.1} parent=1 // pred_region
      %181 = dma.done [#allocation18], 512
    $region113: #{tpu_custom_call.1} parent=1 // pred_fallthru
      _
    %v182 = vld [vmem:[#allocation2] sm:$0xff]
    %v183 = vld [vmem:[#allocation5] sm:$0xff]
    %v184 = vld [vmem:[#allocation7] sm:$0xff]
    %v185 = vld [vmem:[#allocation7 + $0x8] sm:$0xff]
    %v186 = vld [vmem:[#allocation7 + $0x10] sm:$0xff]
    %v187 = vld [vmem:[#allocation7 + $0x18] sm:$0xff]
    %v188 = vld [vmem:[%s3] sm:$0x1]
    %v190 = vlaneseq
    %v191 = vshrl.u32 %v190, 7
    %v192 = vsub.s32 0, %v191
    %v193 = vrot.slane %v188, %v192
    %vm195 = vcmask 261120
    %v197 = vsel %vm195, %v182, 0
    %199 = vmatprep.subr.mxu0 0.0
    %200 = vmatpush1.msra.mxu0 %v184
    %201 = vmatprep.subr.mxu0 0.0
    %202 = vmatpush1.msra.mxu0 %v185
    %203 = vmatprep.subr.mxu0 0.0
    %204 = vmatpush1.msra.mxu0 %v186
    %205 = vmatprep.subr.mxu0 0.0
    %206 = vmatpush1.msra.mxu0 %v187
    %207 = vmatprep.subr.mxu0 0.0
    %208 = vmatpush1.msra.mxu0 0.0
    %209 = vmatprep.subr.mxu0 0.0
    %210 = vmatpush1.msra.mxu0 0.0
    %211 = vmatprep.subr.mxu0 0.0
    %212 = vmatpush1.msra.mxu0 0.0
    %213 = vmatprep.subr.mxu0 0.0
    %214 = vmatpush1.msra.mxu0 0.0
    %215 = vmatprep.subr.mxu0 0.0
    %216 = vmatpush1.msra.mxu0 0.0
    %217 = vmatprep.subr.mxu0 0.0
    %218 = vmatpush1.msra.mxu0 0.0
    %219 = vmatprep.subr.mxu0 0.0
    %220 = vmatpush1.msra.mxu0 0.0
    %221 = vmatprep.subr.mxu0 0.0
    %222 = vmatpush1.msra.mxu0 0.0
    %223 = vmatprep.subr.mxu0 0.0
    %224 = vmatpush1.msra.mxu0 0.0
    %225 = vmatprep.subr.mxu0 0.0
    %226 = vmatpush1.msra.mxu0 0.0
    %227 = vmatprep.subr.mxu0 0.0
    %228 = vmatpush1.msra.mxu0 0.0
    %229 = vmatprep.subr.mxu0 0.0
    %230 = vmatpush1.msra.mxu0 0.0
    %231 = vmatprep.subr.mxu0 0.0
    %232 = vmatpush1.msra.mxu0 0.0
    %233 = vmatprep.subr.mxu0 0.0
    %234 = vmatpush1.msra.mxu0 0.0
    %235 = vmatprep.subr.mxu0 0.0
    %236 = vmatpush1.msra.mxu0 0.0
    %237 = vmatprep.subr.mxu0 0.0
    %238 = vmatpush1.msra.mxu0 0.0
    %239 = vmatprep.subr.mxu0 0.0
    %240 = vmatpush1.msra.mxu0 0.0
    %241 = vmatprep.subr.mxu0 0.0
    %242 = vmatpush1.msra.mxu0 0.0
    %243 = vmatprep.subr.mxu0 0.0
    %244 = vmatpush1.msra.mxu0 0.0
    %245 = vmatprep.subr.mxu0 0.0
    %246 = vmatpush1.msra.mxu0 0.0
    %247 = vmatprep.subr.mxu0 0.0
    %248 = vmatpush1.msra.mxu0 0.0
    %249 = vmatprep.subr.mxu0 0.0
    %250 = vmatpush1.msra.mxu0 0.0
    %251 = vmatprep.subr.mxu0 0.0
    %252 = vmatpush1.msra.mxu0 0.0
    %253 = vmatprep.subr.mxu0 0.0
    %254 = vmatpush1.msra.mxu0 0.0
    %255 = vmatprep.subr.mxu0 0.0
    %256 = vmatpush1.msra.mxu0 0.0
    %257 = vmatprep.subr.mxu0 0.0
    %258 = vmatpush1.msra.mxu0 0.0
    %259 = vmatprep.subr.mxu0 0.0
    %260 = vmatpush1.msra.mxu0 0.0
    %261 = vmatprep.subr.mxu0 0.0
    %262 = vmatpush1.msra.mxu0 0.0
    %263 = vmatprep.mubr.f32.mxu0 0.0
    %264 = vmatmul.mubr.f32.gmra.mrb[0].mxu0 %v197
    %v265 = vpop.f32.mrb[0].mxu0
    %v266 = vadd.f32 %v193, %v265
    %v267 = vpop.f32.mrb[0].mxu0
    %268 = vdwg.mxu0
    %v269 = vld [vmem:[#allocation8] sm:$0x1]
    %v270 = vld [vmem:[#allocation10] sm:$0x1]
    %v271 = vsel %vm195, %v266, 0.0
    %272 = vadd.xlane.f32.xlu0 %v271
    %v273 = vpop.xlane.xlu0 %272
    %v274 = vrcp.pop 32.0
    %v275 = vmul.f32 %v273, %v274
    %v276 = vsub.f32 %v266, %v275
    %v277 = vmul.f32 %v276, %v276
    %v278 = vsel %vm195, %v277, 0.0
    %279 = vadd.xlane.f32.xlu0 %v278
    %v280 = vpop.xlane.xlu0 %279
    %v281 = vmul.f32 %v280, %v274
    %v282 = vadd.f32 %v281, 1e-05
    %v283 = vrsqrt.pop %v282
    %v284 = vmul.f32 %v276, %v283
    %v286 = vlaneseq
    %v287 = vshrl.u32 %v286, 7
    %v288 = vsub.s32 0, %v287
    %v289 = vrot.slane %v269, %v288
    %v291 = vmul.f32 %v284, %v289
    %v293 = vlaneseq
    %v294 = vshrl.u32 %v293, 7
    %v295 = vsub.s32 0, %v294
    %v296 = vrot.slane %v270, %v295
    %v298 = vadd.f32 %v291, %v296
    %v299 = vld [vmem:[#allocation11] sm:$0xff]
    %v300 = vld [vmem:[#allocation11 + $0x8] sm:$0xff]
    %v301 = vld [vmem:[#allocation11 + $0x10] sm:$0xff]
    %v302 = vld [vmem:[#allocation11 + $0x18] sm:$0xff]
    %v303 = vld [vmem:[%s7] sm:$0xff]
    %vm304 = vcmask 64512
    %v306 = vsel %vm304, %v183, 0
    %308 = vmatprep.subr.mxu0 0.0
    %309 = vmatpush1.msra.mxu0 %v303
    %310 = vmatprep.subr.mxu0 0.0
    %311 = vmatpush1.msra.mxu0 0.0
    %312 = vmatprep.subr.mxu0 0.0
    %313 = vmatpush1.msra.mxu0 0.0
    %314 = vmatprep.subr.mxu0 0.0
    %315 = vmatpush1.msra.mxu0 0.0
    %316 = vmatprep.subr.mxu0 0.0
    %317 = vmatpush1.msra.mxu0 0.0
    %318 = vmatprep.subr.mxu0 0.0
    %319 = vmatpush1.msra.mxu0 0.0
    %320 = vmatprep.subr.mxu0 0.0
    %321 = vmatpush1.msra.mxu0 0.0
    %322 = vmatprep.subr.mxu0 0.0
    %323 = vmatpush1.msra.mxu0 0.0
    %324 = vmatprep.subr.mxu0 0.0
    %325 = vmatpush1.msra.mxu0 0.0
    %326 = vmatprep.subr.mxu0 0.0
    %327 = vmatpush1.msra.mxu0 0.0
    %328 = vmatprep.subr.mxu0 0.0
    %329 = vmatpush1.msra.mxu0 0.0
    %330 = vmatprep.subr.mxu0 0.0
    %331 = vmatpush1.msra.mxu0 0.0
    %332 = vmatprep.subr.mxu0 0.0
    %333 = vmatpush1.msra.mxu0 0.0
    %334 = vmatprep.subr.mxu0 0.0
    %335 = vmatpush1.msra.mxu0 0.0
    %336 = vmatprep.subr.mxu0 0.0
    %337 = vmatpush1.msra.mxu0 0.0
    %338 = vmatprep.subr.mxu0 0.0
    %339 = vmatpush1.msra.mxu0 0.0
    %340 = vmatprep.subr.mxu0 0.0
    %341 = vmatpush1.msra.mxu0 0.0
    %342 = vmatprep.subr.mxu0 0.0
    %343 = vmatpush1.msra.mxu0 0.0
    %344 = vmatprep.subr.mxu0 0.0
    %345 = vmatpush1.msra.mxu0 0.0
    %346 = vmatprep.subr.mxu0 0.0
    %347 = vmatpush1.msra.mxu0 0.0
    %348 = vmatprep.subr.mxu0 0.0
    %349 = vmatpush1.msra.mxu0 0.0
    %350 = vmatprep.subr.mxu0 0.0
    %351 = vmatpush1.msra.mxu0 0.0
    %352 = vmatprep.subr.mxu0 0.0
    %353 = vmatpush1.msra.mxu0 0.0
    %354 = vmatprep.subr.mxu0 0.0
    %355 = vmatpush1.msra.mxu0 0.0
    %356 = vmatprep.subr.mxu0 0.0
    %357 = vmatpush1.msra.mxu0 0.0
    %358 = vmatprep.subr.mxu0 0.0
    %359 = vmatpush1.msra.mxu0 0.0
    %360 = vmatprep.subr.mxu0 0.0
    %361 = vmatpush1.msra.mxu0 0.0
    %362 = vmatprep.subr.mxu0 0.0
    %363 = vmatpush1.msra.mxu0 0.0
    %364 = vmatprep.subr.mxu0 0.0
    %365 = vmatpush1.msra.mxu0 0.0
    %366 = vmatprep.subr.mxu0 0.0
    %367 = vmatpush1.msra.mxu0 0.0
    %368 = vmatprep.subr.mxu0 0.0
    %369 = vmatpush1.msra.mxu0 0.0
    %370 = vmatprep.subr.mxu0 0.0
    %371 = vmatpush1.msra.mxu0 0.0
    %372 = vmatprep.mubr.f32.mxu0 0.0
    %373 = vmatmul.mubr.f32.gmra.mrb[0].mxu0 %v306
    %v374 = vpop.f32.mrb[0].mxu0
    %v375 = vadd.f32 0.0, %v374
    %v376 = vpop.f32.mrb[0].mxu0
    %377 = vdwg.mxu0
    %v379 = vsel %vm195, %v298, 0
    %381 = vmatprep.subr.mxu0 0.0
    %382 = vmatpush1.msra.mxu0 %v299
    %383 = vmatprep.subr.mxu0 0.0
    %384 = vmatpush1.msra.mxu0 %v300
    %385 = vmatprep.subr.mxu0 0.0
    %386 = vmatpush1.msra.mxu0 %v301
    %387 = vmatprep.subr.mxu0 0.0
    %388 = vmatpush1.msra.mxu0 %v302
    %389 = vmatprep.subr.mxu0 0.0
    %390 = vmatpush1.msra.mxu0 0.0
    %391 = vmatprep.subr.mxu0 0.0
    %392 = vmatpush1.msra.mxu0 0.0
    %393 = vmatprep.subr.mxu0 0.0
    %394 = vmatpush1.msra.mxu0 0.0
    %395 = vmatprep.subr.mxu0 0.0
    %396 = vmatpush1.msra.mxu0 0.0
    %397 = vmatprep.subr.mxu0 0.0
    %398 = vmatpush1.msra.mxu0 0.0
    %399 = vmatprep.subr.mxu0 0.0
    %400 = vmatpush1.msra.mxu0 0.0
    %401 = vmatprep.subr.mxu0 0.0
    %402 = vmatpush1.msra.mxu0 0.0
    %403 = vmatprep.subr.mxu0 0.0
    %404 = vmatpush1.msra.mxu0 0.0
    %405 = vmatprep.subr.mxu0 0.0
    %406 = vmatpush1.msra.mxu0 0.0
    %407 = vmatprep.subr.mxu0 0.0
    %408 = vmatpush1.msra.mxu0 0.0
    %409 = vmatprep.subr.mxu0 0.0
    %410 = vmatpush1.msra.mxu0 0.0
    %411 = vmatprep.subr.mxu0 0.0
    %412 = vmatpush1.msra.mxu0 0.0
    %413 = vmatprep.subr.mxu0 0.0
    %414 = vmatpush1.msra.mxu0 0.0
    %415 = vmatprep.subr.mxu0 0.0
    %416 = vmatpush1.msra.mxu0 0.0
    %417 = vmatprep.subr.mxu0 0.0
    %418 = vmatpush1.msra.mxu0 0.0
    %419 = vmatprep.subr.mxu0 0.0
    %420 = vmatpush1.msra.mxu0 0.0
    %421 = vmatprep.subr.mxu0 0.0
    %422 = vmatpush1.msra.mxu0 0.0
    %423 = vmatprep.subr.mxu0 0.0
    %424 = vmatpush1.msra.mxu0 0.0
    %425 = vmatprep.subr.mxu0 0.0
    %426 = vmatpush1.msra.mxu0 0.0
    %427 = vmatprep.subr.mxu0 0.0
    %428 = vmatpush1.msra.mxu0 0.0
    %429 = vmatprep.subr.mxu0 0.0
    %430 = vmatpush1.msra.mxu0 0.0
    %431 = vmatprep.subr.mxu0 0.0
    %432 = vmatpush1.msra.mxu0 0.0
    %433 = vmatprep.subr.mxu0 0.0
    %434 = vmatpush1.msra.mxu0 0.0
    %435 = vmatprep.subr.mxu0 0.0
    %436 = vmatpush1.msra.mxu0 0.0
    %437 = vmatprep.subr.mxu0 0.0
    %438 = vmatpush1.msra.mxu0 0.0
    %439 = vmatprep.subr.mxu0 0.0
    %440 = vmatpush1.msra.mxu0 0.0
    %441 = vmatprep.subr.mxu0 0.0
    %442 = vmatpush1.msra.mxu0 0.0
    %443 = vmatprep.subr.mxu0 0.0
    %444 = vmatpush1.msra.mxu0 0.0
    %445 = vmatprep.mubr.f32.mxu0 0.0
    %446 = vmatmul.mubr.f32.gmra.mrb[0].mxu0 %v379
    %v447 = vpop.f32.mrb[0].mxu0
    %v448 = vadd.f32 %v375, %v447
    %v449 = vpop.f32.mrb[0].mxu0
    %450 = vdwg.mxu0
    %v451 = vld [vmem:[#allocation13] sm:$0x1]
    %v453 = vlaneseq
    %v454 = vshrl.u32 %v453, 7
    %v455 = vsub.s32 0, %v454
    %v456 = vrot.slane %v451, %v455
    %v458 = vadd.f32 %v448, %v456
    %v459 = vld [vmem:[#allocation14] sm:$0x1]
    %v460 = vld [vmem:[#allocation16] sm:$0x1]
    %v461 = vsel %vm195, %v458, 0.0
    %462 = vadd.xlane.f32.xlu0 %v461
    %v463 = vpop.xlane.xlu0 %462
    %v464 = vmul.f32 %v463, %v274
    %v465 = vsub.f32 %v458, %v464
    %v466 = vmul.f32 %v465, %v465
    %v467 = vsel %vm195, %v466, 0.0
    %468 = vadd.xlane.f32.xlu0 %v467
    %v469 = vpop.xlane.xlu0 %468
    %v470 = vmul.f32 %v469, %v274
    %v471 = vadd.f32 %v470, 1e-05
    %v472 = vrsqrt.pop %v471
    %v473 = vmul.f32 %v465, %v472
    %v475 = vlaneseq
    %v476 = vshrl.u32 %v475, 7
    %v477 = vsub.s32 0, %v476
    %v478 = vrot.slane %v459, %v477
    %v480 = vmul.f32 %v473, %v478
    %v482 = vlaneseq
    %v483 = vshrl.u32 %v482, 7
    %v484 = vsub.s32 0, %v483
    %v485 = vrot.slane %v460, %v484
    %v487 = vadd.f32 %v480, %v485
    %v488 = vmax.f32 %v487, 0.0
    %v489 = vld [vmem:[%s11] sm:$0xff]
    %v490 = vld [vmem:[%s11 + $0x8] sm:$0xff]
    %v491 = vld [vmem:[%s11 + $0x10] sm:$0xff]
    %v492 = vld [vmem:[%s11 + $0x18] sm:$0xff]
    %v493 = vld [vmem:[%s12] sm:$0x1]
    %v495 = vlaneseq
    %v496 = vshrl.u32 %v495, 7
    %v497 = vsub.s32 0, %v496
    %v498 = vrot.slane %v493, %v497
    %v501 = vsel %vm195, %v488, 0
    %503 = vmatprep.subr.mxu0 0.0
    %504 = vmatpush1.msra.mxu0 %v489
    %505 = vmatprep.subr.mxu0 0.0
    %506 = vmatpush1.msra.mxu0 %v490
    %507 = vmatprep.subr.mxu0 0.0
    %508 = vmatpush1.msra.mxu0 %v491
    %509 = vmatprep.subr.mxu0 0.0
    %510 = vmatpush1.msra.mxu0 %v492
    %511 = vmatprep.subr.mxu0 0.0
    %512 = vmatpush1.msra.mxu0 0.0
    %513 = vmatprep.subr.mxu0 0.0
    %514 = vmatpush1.msra.mxu0 0.0
    %515 = vmatprep.subr.mxu0 0.0
    %516 = vmatpush1.msra.mxu0 0.0
    %517 = vmatprep.subr.mxu0 0.0
    %518 = vmatpush1.msra.mxu0 0.0
    %519 = vmatprep.subr.mxu0 0.0
    %520 = vmatpush1.msra.mxu0 0.0
    %521 = vmatprep.subr.mxu0 0.0
    %522 = vmatpush1.msra.mxu0 0.0
    %523 = vmatprep.subr.mxu0 0.0
    %524 = vmatpush1.msra.mxu0 0.0
    %525 = vmatprep.subr.mxu0 0.0
    %526 = vmatpush1.msra.mxu0 0.0
    %527 = vmatprep.subr.mxu0 0.0
    %528 = vmatpush1.msra.mxu0 0.0
    %529 = vmatprep.subr.mxu0 0.0
    %530 = vmatpush1.msra.mxu0 0.0
    %531 = vmatprep.subr.mxu0 0.0
    %532 = vmatpush1.msra.mxu0 0.0
    %533 = vmatprep.subr.mxu0 0.0
    %534 = vmatpush1.msra.mxu0 0.0
    %535 = vmatprep.subr.mxu0 0.0
    %536 = vmatpush1.msra.mxu0 0.0
    %537 = vmatprep.subr.mxu0 0.0
    %538 = vmatpush1.msra.mxu0 0.0
    %539 = vmatprep.subr.mxu0 0.0
    %540 = vmatpush1.msra.mxu0 0.0
    %541 = vmatprep.subr.mxu0 0.0
    %542 = vmatpush1.msra.mxu0 0.0
    %543 = vmatprep.subr.mxu0 0.0
    %544 = vmatpush1.msra.mxu0 0.0
    %545 = vmatprep.subr.mxu0 0.0
    %546 = vmatpush1.msra.mxu0 0.0
    %547 = vmatprep.subr.mxu0 0.0
    %548 = vmatpush1.msra.mxu0 0.0
    %549 = vmatprep.subr.mxu0 0.0
    %550 = vmatpush1.msra.mxu0 0.0
    %551 = vmatprep.subr.mxu0 0.0
    %552 = vmatpush1.msra.mxu0 0.0
    %553 = vmatprep.subr.mxu0 0.0
    %554 = vmatpush1.msra.mxu0 0.0
    %555 = vmatprep.subr.mxu0 0.0
    %556 = vmatpush1.msra.mxu0 0.0
    %557 = vmatprep.subr.mxu0 0.0
    %558 = vmatpush1.msra.mxu0 0.0
    %559 = vmatprep.subr.mxu0 0.0
    %560 = vmatpush1.msra.mxu0 0.0
    %561 = vmatprep.subr.mxu0 0.0
    %562 = vmatpush1.msra.mxu0 0.0
    %563 = vmatprep.subr.mxu0 0.0
    %564 = vmatpush1.msra.mxu0 0.0
    %565 = vmatprep.subr.mxu0 0.0
    %566 = vmatpush1.msra.mxu0 0.0
    %567 = vmatprep.mubr.f32.mxu0 0.0
    %568 = vmatmul.mubr.f32.gmra.mrb[0].mxu0 %v501
    %v569 = vpop.f32.mrb[0].mxu0
    %v570 = vadd.f32 %v498, %v569
    %v571 = vpop.f32.mrb[0].mxu0
    %572 = vdwg.mxu0
    %v573 = vld [vmem:[%s13] sm:$0x1]
    %v574 = vld [vmem:[%s14] sm:$0x1]
    %v575 = vsel %vm195, %v570, 0.0
    %576 = vadd.xlane.f32.xlu0 %v575
    %v577 = vpop.xlane.xlu0 %576
    %v578 = vmul.f32 %v577, %v274
    %v579 = vsub.f32 %v570, %v578
    %v580 = vmul.f32 %v579, %v579
    %v581 = vsel %vm195, %v580, 0.0
    %582 = vadd.xlane.f32.xlu0 %v581
    %v583 = vpop.xlane.xlu0 %582
    %v584 = vmul.f32 %v583, %v274
    %v585 = vadd.f32 %v584, 1e-05
    %v586 = vrsqrt.pop %v585
    %v587 = vmul.f32 %v579, %v586
    %v589 = vlaneseq
    %v590 = vshrl.u32 %v589, 7
    %v591 = vsub.s32 0, %v590
    %v592 = vrot.slane %v573, %v591
    %v594 = vmul.f32 %v587, %v592
    %v596 = vlaneseq
    %v597 = vshrl.u32 %v596, 7
    %v598 = vsub.s32 0, %v597
    %v599 = vrot.slane %v574, %v598
    %v601 = vadd.f32 %v594, %v599
    %v602 = vmax.f32 %v601, 0.0
    %v603 = vld [vmem:[#allocation17] sm:$0xff]
    %v604 = vld [vmem:[#allocation17 + $0x8] sm:$0xff]
    %v605 = vld [vmem:[#allocation17 + $0x10] sm:$0xff]
    %v606 = vld [vmem:[#allocation17 + $0x18] sm:$0xff]
    %v607 = vld [vmem:[%s16] sm:$0x1]
    %v609 = vlaneseq
    %v610 = vshrl.u32 %v609, 7
    %v611 = vsub.s32 0, %v610
    %v612 = vrot.slane %v607, %v611
    %v615 = vsel %vm195, %v602, 0
    %617 = vmatprep.subr.mxu0 0.0
    %618 = vmatpush1.msra.mxu0 %v603
    %619 = vmatprep.subr.mxu0 0.0
    %620 = vmatpush1.msra.mxu0 %v604
    %621 = vmatprep.subr.mxu0 0.0
    %622 = vmatpush1.msra.mxu0 %v605
    %623 = vmatprep.subr.mxu0 0.0
    %624 = vmatpush1.msra.mxu0 %v606
    %625 = vmatprep.subr.mxu0 0.0
    %626 = vmatpush1.msra.mxu0 0.0
    %627 = vmatprep.subr.mxu0 0.0
    %628 = vmatpush1.msra.mxu0 0.0
    %629 = vmatprep.subr.mxu0 0.0
    %630 = vmatpush1.msra.mxu0 0.0
    %631 = vmatprep.subr.mxu0 0.0
    %632 = vmatpush1.msra.mxu0 0.0
    %633 = vmatprep.subr.mxu0 0.0
    %634 = vmatpush1.msra.mxu0 0.0
    %635 = vmatprep.subr.mxu0 0.0
    %636 = vmatpush1.msra.mxu0 0.0
    %637 = vmatprep.subr.mxu0 0.0
    %638 = vmatpush1.msra.mxu0 0.0
    %639 = vmatprep.subr.mxu0 0.0
    %640 = vmatpush1.msra.mxu0 0.0
    %641 = vmatprep.subr.mxu0 0.0
    %642 = vmatpush1.msra.mxu0 0.0
    %643 = vmatprep.subr.mxu0 0.0
    %644 = vmatpush1.msra.mxu0 0.0
    %645 = vmatprep.subr.mxu0 0.0
    %646 = vmatpush1.msra.mxu0 0.0
    %647 = vmatprep.subr.mxu0 0.0
    %648 = vmatpush1.msra.mxu0 0.0
    %649 = vmatprep.subr.mxu0 0.0
    %650 = vmatpush1.msra.mxu0 0.0
    %651 = vmatprep.subr.mxu0 0.0
    %652 = vmatpush1.msra.mxu0 0.0
    %653 = vmatprep.subr.mxu0 0.0
    %654 = vmatpush1.msra.mxu0 0.0
    %655 = vmatprep.subr.mxu0 0.0
    %656 = vmatpush1.msra.mxu0 0.0
    %657 = vmatprep.subr.mxu0 0.0
    %658 = vmatpush1.msra.mxu0 0.0
    %659 = vmatprep.subr.mxu0 0.0
    %660 = vmatpush1.msra.mxu0 0.0
    %661 = vmatprep.subr.mxu0 0.0
    %662 = vmatpush1.msra.mxu0 0.0
    %663 = vmatprep.subr.mxu0 0.0
    %664 = vmatpush1.msra.mxu0 0.0
    %665 = vmatprep.subr.mxu0 0.0
    %666 = vmatpush1.msra.mxu0 0.0
    %667 = vmatprep.subr.mxu0 0.0
    %668 = vmatpush1.msra.mxu0 0.0
    %669 = vmatprep.subr.mxu0 0.0
    %670 = vmatpush1.msra.mxu0 0.0
    %671 = vmatprep.subr.mxu0 0.0
    %672 = vmatpush1.msra.mxu0 0.0
    %673 = vmatprep.subr.mxu0 0.0
    %674 = vmatpush1.msra.mxu0 0.0
    %675 = vmatprep.subr.mxu0 0.0
    %676 = vmatpush1.msra.mxu0 0.0
    %677 = vmatprep.subr.mxu0 0.0
    %678 = vmatpush1.msra.mxu0 0.0
    %679 = vmatprep.subr.mxu0 0.0
    %680 = vmatpush1.msra.mxu0 0.0
    %681 = vmatprep.mubr.f32.mxu0 0.0
    %682 = vmatmul.mubr.f32.gmra.mrb[0].mxu0 %v615
    %v683 = vpop.f32.mrb[0].mxu0
    %v684 = vadd.f32 %v612, %v683
    %v685 = vpop.f32.mrb[0].mxu0
    %686 = vdwg.mxu0
    %v687 = vld [vmem:[%s17] sm:$0x1]
    %vm688 = vcmp.gt.f32.partialorder %v687, 0.0
    %v689 = vmax.f32 %v684, 0.0
    %vm690 = vcmp.ne.f32.partialorder %v684, %v684
    %v691 = vadd.f32 %v684, 0.0
    %v692 = vand.u32 2147483647, %v684
    %v693 = vsub.f32 0.0, %v692
    %v694 = vmul.f32 %v693, 1.442695
    %v695 = vpow.pop %v694
    %v696 = vadd.f32 %v695, 1.0
    %v697 = vlog2.pop %v696
    %v698 = vmul.f32 %v697, 0.6931472
    %v699 = vmul.f32 -0.5, %v695
    %v700 = vadd.f32 %v699, 1.0
    %v701 = vmul.f32 %v700, %v695
    %v702 = vand.u32 2147483647, %v695
    %vm703 = vcmp.lt.f32.partialorder %v702, 0.0004427343
    %v704 = vsel %vm703, %v701, %v698
    %v705 = vadd.f32 %v689, %v704
    %v706 = vsel %vm690, %v691, %v705
    %v707 = vmul.f32 %v706, 0.001442695
    %v708 = vadd.f32 %v707, 0.0001
    %v709 = vsel %vm688, 1, 0
    %v710 = vlaneseq
    %v711 = vshrl.u32 %v710, 7
    %v712 = vsub.s32 0, %v711
    %v713 = vrot.slane %v709, %v712
    %vm714 = vcmp.eq.s32.totalorder %v713, 1
    %v715 = vsel %vm714, %v708, %v684
    %716 = vst [vmem:[#allocation19] sm:$0xff] %v715
    // Predicated region
    $region114: #{tpu_custom_call.1} parent=1 // pred_check
      _
    $region115: #{tpu_custom_call.1} parent=1 // pred_check_branch
      %718 = sbr.rel (0) target = $region117
    $region116: #{tpu_custom_call.1} parent=1 // pred_region
      %s720 = ssub.s32 128, 128
      %721 = vsyncadd [#allocation4], %s720
      %s723 = sshll.u32 [#allocation19], 4
      %s724 = int_to_ptr.vmem [resolvable:$true] %s723
      %726 = dma.vmem_to_hbm [thread:$0]  %s724, 128, %s18, [#allocation4]
    $region117: #{tpu_custom_call.1} parent=1 // pred_fallthru
      _
    // Predicated region
    $region118: #{tpu_custom_call.1} parent=1 // pred_check
      _
    $region119: #{tpu_custom_call.1} parent=1 // pred_check_branch
      %728 = sbr.rel (0) target = $region121
    $region120: #{tpu_custom_call.1} parent=1 // pred_region
      %729 = dma.done [#allocation4], 128
    $region121: #{tpu_custom_call.1} parent=1 // pred_fallthru
      _
    %730 = vsyncpa [#allocation3], 1
    %731 = vsyncpa [#allocation6], 1
    %732 = vsyncpa [#allocation9], 1
    %733 = vsyncpa [#allocation12], 1
    %734 = vsyncpa [#allocation15], 1
    %735 = vsyncpa [#allocation18], 1
    %736 = vsyncpa [#allocation4], 1

</llo_original>
